<compile_context>
chip_gen: v7x
topology: tpu7x:2x2x1
jax: 0.10.0
libtpu: 0.0.40
codegen_flags: <defaults>
</compile_context>

<pallas_src>
import functools

import numpy as np
import jax
import jax.numpy as jnp
from jax import lax
from jax.experimental import pallas as pl
from jax.experimental.pallas import tpu as pltpu

_SELU_ALPHA = 1.6732632423543772848170429916717
_SELU_SCALE = 1.0507009873554804934193349852946
_BN_EPS = 1e-5
_CONF_RATIO = 0.1   # cfg.gamma in the PyTorch code


# ----------------------------------------------------------------------------
# Pallas kernel: fused 3x3 conv + BatchNorm(batch stats) + SELU
# ----------------------------------------------------------------------------
def _conv3x3_bn_selu_kernel(x_ref, w_ref, m_ref, g_ref, b_ref, o_ref, col_ref,
                            *, wp, inv_cnt, eps):
    """
    x_ref:   (Cin, Lpad + 2*wp + 2)  bf16, zero halo-padded flattened input
    w_ref:   (Cout, 9*Cin)           bf16 conv taps; tap t == kh*3 + kw
    m_ref:   (1, Lpad)               f32, 1.0 at valid (interior, real) pos
    g_ref:   (Cout, 1)               BN gamma
    b_ref:   (Cout, 1)               BN beta
    o_ref:   (Cout, Lpad)            f32 output on the padded flat grid
    col_ref: (9*Cin, Lpad)           bf16 im2col scratch
    """
    cout, lpad = o_ref.shape
    cin = x_ref.shape[0]

    # Stack the 9 lane-shifted views of x into the im2col scratch (bf16).
    # Offsets are python ints -> static ref slices (fully unrolled).
    for t in range(9):
        off = (t // 3) * wp + (t % 3)
        col_ref[t * cin:(t + 1) * cin, :] = x_ref[:, off:off + lpad]

    # One K-folded MXU matmul: (Cout, 9*Cin) @ (9*Cin, Lpad), f32 accumulate.
    acc = jnp.dot(w_ref[...], col_ref[...], preferred_element_type=jnp.float32)

    # One-pass BatchNorm batch statistics over valid positions only.
    mask = m_ref[...]                               # (1, Lpad), {0,1}
    accm = acc * mask
    s1 = jnp.sum(accm, axis=1, keepdims=True)       # (Cout, 1)
    s2 = jnp.sum(accm * accm, axis=1, keepdims=True)
    mean = s1 * inv_cnt
    var = jnp.maximum(s2 * inv_cnt - mean * mean, 0.0)   # guard cancellation
    scale = g_ref[...] * lax.rsqrt(var + eps)
    shift = b_ref[...] - mean * scale

    y = acc * scale + shift
    # SELU (expm1 written as exp-1: Mosaic-safe; abs err ~1e-7 in f32).
    o_ref[...] = _SELU_SCALE * jnp.where(
        y > 0, y, _SELU_ALPHA * (jnp.exp(y) - 1.0))


def _interior_mask(n, hp, wp, lpad):
    m = np.zeros((n, hp, wp), np.float32)
    m[:, 1:-1, 1:-1] = 1.0
    out = np.zeros((1, lpad), np.float32)
    out[0, :n * hp * wp] = m.reshape(-1)
    return out


def conv3x3_bn_selu(x_cm, w, gamma, beta, *, eps=_BN_EPS):
    """BasicConv2d(kernel=3, stride=1, pad=1, bias=False) + BN + SELU.

    x_cm:        (Cin, N, H, W)   channel-major input
    w:           (Cout, Cin, 3, 3)
    gamma, beta: (Cout,)
    returns      (Cout, N, H, W)  channel-major output
    """
    cin, n, h, wd = x_cm.shape
    cout = w.shape[0]
    hp, wp = h + 2, wd + 2
    l = n * hp * wp
    lpad = ((l + 127) // 128) * 128                      # lane-dense width

    xp = jnp.pad(x_cm, ((0, 0), (0, 0), (1, 1), (1, 1)))  # spatial halo
    xf = xp.reshape(cin, l)                                # lane-dense flat
    # flat halo for the +/- (wp+1) tap shifts, plus lane-pad tail to Lpad
    xe = jnp.pad(xf, ((0, 0), (wp + 1, wp + 1 + lpad - l))).astype(jnp.bfloat16)

    w2d = jnp.transpose(w, (0, 2, 3, 1)).reshape(cout, 9 * cin)
    w2d = w2d.astype(jnp.bfloat16)
    mask = jnp.asarray(_interior_mask(n, hp, wp, lpad))   # trace-time const

    kern = functools.partial(_conv3x3_bn_selu_kernel, wp=wp,
                             inv_cnt=1.0 / float(n * h * wd), eps=eps)
    out_flat = pl.pallas_call(
        kern,
        out_shape=jax.ShapeDtypeStruct((cout, lpad), jnp.float32),
        in_specs=[pl.BlockSpec(memory_space=pltpu.MemorySpace.VMEM)] * 5,
        out_specs=pl.BlockSpec(memory_space=pltpu.MemorySpace.VMEM),
        scratch_shapes=[pltpu.VMEM((9 * cin, lpad), jnp.bfloat16)],
        compiler_params=pltpu.CompilerParams(
            vmem_limit_bytes=24 * 1024 * 1024),
    )(xe, w2d, mask,
      gamma.reshape(cout, 1).astype(jnp.float32),
      beta.reshape(cout, 1).astype(jnp.float32))
    # TODO(synk): on v7x (2 TensorCores) the 96/112-channel layers could add a
    # Cout-tiled 'parallel' 1-D grid (BN stats are per-output-channel, so no
    # cross-tile reduction); grid-less is best on v5e/v6e at these sizes.
    return out_flat[:, :l].reshape(cout, n, hp, wp)[:, :, 1:-1, 1:-1]


def conv3x3_bn_selu_ref(x_cm, w, gamma, beta, *, eps=_BN_EPS):
    """Pure-XLA reference of the fused block (for a correctness unit check)."""
    x = jnp.transpose(x_cm, (1, 0, 2, 3))                 # NCHW
    conv = lax.conv_general_dilated(
        x, w, (1, 1), ((1, 1), (1, 1)),
        dimension_numbers=("NCHW", "OIHW", "NCHW"),
        precision=lax.Precision.HIGHEST)
    conv = jnp.transpose(conv, (1, 0, 2, 3))              # channel-major
    mu = jnp.mean(conv, axis=(1, 2, 3), keepdims=True)
    var = jnp.mean((conv - mu) ** 2, axis=(1, 2, 3), keepdims=True)
    y = (conv - mu) * lax.rsqrt(var + eps) * gamma[:, None, None, None] \
        + beta[:, None, None, None]
    return jax.nn.selu(y)


# ----------------------------------------------------------------------------
# JAX glue: bilinear x2 upsample (align_corners=True) and UnionAttentionModule
# ----------------------------------------------------------------------------
def _upsample_matrix(s_in):
    s_out = 2 * s_in
    if s_in == 1:
        return np.ones((s_out, s_in), np.float32)
    src = np.arange(s_out, dtype=np.float64) * (s_in - 1) / (s_out - 1)
    i0 = np.clip(np.floor(src).astype(np.int64), 0, s_in - 1)
    i1 = np.clip(i0 + 1, 0, s_in - 1)
    w1 = (src - i0).astype(np.float32)
    m = np.zeros((s_out, s_in), np.float32)
    m[np.arange(s_out), i0] += 1.0 - w1
    m[np.arange(s_out), i1] += w1
    return m


def upsample2x(x_cm):
    """nn.Upsample(scale_factor=2, mode='bilinear', align_corners=True)."""
    _, _, h, w = x_cm.shape
    mh = jnp.asarray(_upsample_matrix(h))
    mw = jnp.asarray(_upsample_matrix(w))
    y = jnp.einsum('cnhw,Hh->cnHw', x_cm, mh)
    return jnp.einsum('cnHw,Ww->cnHW', y, mw)


def uam_forward(p, x, *, eps=_BN_EPS):
    """UnionAttentionModule forward; x is channel-major (C, N, H, W)."""
    # ---- Channel_Tracer ----
    gap = jnp.mean(x, axis=(2, 3))                            # (C, N)  GAP
    mu = jnp.mean(gap, axis=1, keepdims=True)                 # BN over batch
    var = jnp.mean((gap - mu) ** 2, axis=1, keepdims=True)
    xn = (gap - mu) * lax.rsqrt(var + eps) * p['norm_g'][:, None] \
        + p['norm_b'][:, None]
    # TODO(synk): Dropout3d(p=0.1) is stochastic in training mode; applied as
    # identity here to keep the forward deterministic.
    q = p['cq'] @ xn                                          # (C, N)
    k = p['ck'] @ xn
    v = p['cv'] @ xn
    logits = jnp.einsum('cn,dn->ncd', q, k)                   # (N, C, C)
    alpha = jax.nn.softmax(logits, axis=-1)
    att = jnp.einsum('ncd,dn->cn', alpha, v)                  # (C, N)
    att = jax.nn.sigmoid(p['fc'] @ att)                       # (C, N)
    x_c = x * att[:, :, None, None] + x

    # ---- bn(X_c), training-mode batch stats ----
    mu2 = jnp.mean(x_c, axis=(1, 2, 3), keepdims=True)
    var2 = jnp.mean((x_c - mu2) ** 2, axis=(1, 2, 3), keepdims=True)
    x_c = (x_c - mu2) * lax.rsqrt(var2 + eps) \
        * p['bn_g'][:, None, None, None] + p['bn_b'][:, None, None, None]

    # ---- confidence masking: per-sample quantile over channels ----
    thr = jnp.quantile(att, _CONF_RATIO, axis=0, keepdims=True)   # (1, N)
    mask = jnp.where(att <= thr, 0.0, att)                         # (C, N)
    x_drop = x_c * mask[:, :, None, None]

    # ---- spatial attention ----
    qs = jnp.einsum('c,cnhw->nhw', p['sq'], x_drop)
    ks = jnp.einsum('c,cnhw->nhw', p['sk'], x_drop)
    vs = jnp.einsum('c,cnhw->nhw', p['sv'], x_drop)
    logits_s = jnp.einsum('niw,njw->nij', qs, ks)                  # (N, H, H)
    alpha_s = jax.nn.softmax(logits_s, axis=-1)
    out = jnp.einsum('nij,njw->niw', alpha_s, vs) + vs             # (N, H, W)
    return out[:, None, :, :]                                      # (N,1,H,W)


def aggregation_forward(params, e4, e3, e2, conv_fn=conv3x3_bn_selu):
    """Forward of the PyTorch `aggregation` module (inputs/output NCHW)."""
    t = lambda a: jnp.transpose(a, (1, 0, 2, 3))       # NCHW -> channel-major
    e4c, e3c, e2c = t(e4), t(e3), t(e2)
    conv = lambda x, pr: conv_fn(x, pr['w'], pr['g'], pr['b'])
    up = upsample2x

    e4_1 = e4c
    e3_1 = conv(up(e4c), params['cu1']) * e3c
    e2_1 = conv(up(up(e4c)), params['cu2']) * conv(up(e3c), params['cu3']) * e2c
    e3_2 = jnp.concatenate([e3_1, conv(up(e4_1), params['cu4'])], axis=0)
    e3_2 = conv(e3_2, params['cc2'])
    e2_2 = jnp.concatenate([e2_1, conv(up(e3_2), params['cu5'])], axis=0)
    x = conv(e2_2, params['cc3'])
    return uam_forward(params['uam'], x)


# ----------------------------------------------------------------------------
# Deterministic synthetic parameters
# ----------------------------------------------------------------------------
def _conv_params(key, cin, cout):
    kw, kg, kb = jax.random.split(key, 3)
    return {
        "w": 0.1 * jax.random.normal(kw, (cout, cin, 3, 3), jnp.float32),
        "g": 1.0 + 0.1 * jax.random.normal(kg, (cout,), jnp.float32),
        "b": 0.05 * jax.random.normal(kb, (cout,), jnp.float32),
    }


def _uam_params(key, c):
    ks = jax.random.split(key, 11)
    s = 1.0 / float(np.sqrt(c))
    nrm = lambda k, shape, sc: sc * jax.random.normal(k, shape, jnp.float32)
    return {
        "norm_g": 1.0 + nrm(ks[0], (c,), 0.1), "norm_b": nrm(ks[1], (c,), 0.05),
        "bn_g": 1.0 + nrm(ks[2], (c,), 0.1),   "bn_b": nrm(ks[3], (c,), 0.05),
        "cq": nrm(ks[4], (c, c), s), "ck": nrm(ks[5], (c, c), s),
        "cv": nrm(ks[6], (c, c), s), "fc": nrm(ks[7], (c, c), s),
        "sq": nrm(ks[8], (c,), s), "sk": nrm(ks[9], (c,), s),
        "sv": nrm(ks[10], (c,), s),
    }


if __name__ == "__main__":
    c0, c1, c2 = 16, 32, 64            # channel = [c0, c1, c2]
    n = 2
    h4 = w4 = 8                        # e4 spatial; e3 = 2x, e2 = 4x

    root = jax.random.PRNGKey(0)
    keys = jax.random.split(root, 12)

    e4 = jax.random.normal(keys[0], (n, c2, h4, w4), jnp.float32)
    e3 = jax.random.normal(keys[1], (n, c1, 2 * h4, 2 * w4), jnp.float32)
    e2 = jax.random.normal(keys[2], (n, c0, 4 * h4, 4 * w4), jnp.float32)

    params = {
        'cu1': _conv_params(keys[3], c2, c1),
        'cu2': _conv_params(keys[4], c2, c0),
        'cu3': _conv_params(keys[5], c1, c0),
        'cu4': _conv_params(keys[6], c2, c2),
        'cu5': _conv_params(keys[7], c2 + c1, c2 + c1),
        'cc2': _conv_params(keys[8], c2 + c1, c2 + c1),
        'cc3': _conv_params(keys[9], c0 + c1 + c2, c0 + c1 + c2),
        'uam': _uam_params(keys[10], c0 + c1 + c2),
    }

    # --- unit-check the fused Pallas kernel vs an XLA reference -------------
    # (bf16 MXU operands + f32 accumulation -> 4e-2 tolerance)
    x_chk = jnp.transpose(e3, (1, 0, 2, 3))                 # (32, 2, 16, 16)
    pr = params['cu3']
    got = jax.block_until_ready(conv3x3_bn_selu(x_chk, pr['w'], pr['g'], pr['b']))
    want = conv3x3_bn_selu_ref(x_chk, pr['w'], pr['g'], pr['b'])
    assert got.shape == want.shape
    assert jnp.allclose(got, want, rtol=4e-2, atol=4e-2), \
        float(jnp.max(jnp.abs(got - want)))

    x_big = jax.random.normal(keys[11], (c0 + c1 + c2, n, 4 * h4, 4 * w4),
                              jnp.float32)
    pr = params['cc3']
    got = jax.block_until_ready(conv3x3_bn_selu(x_big, pr['w'], pr['g'], pr['b']))
    want = conv3x3_bn_selu_ref(x_big, pr['w'], pr['g'], pr['b'])
    assert jnp.allclose(got, want, rtol=4e-2, atol=4e-2), \
        float(jnp.max(jnp.abs(got - want)))

    # --- full aggregation forward (7 fused Pallas convs + JAX glue) ---------
    out = jax.block_until_ready(jax.jit(aggregation_forward)(params, e4, e3, e2))
    assert out.shape == (n, 1, 4 * h4, 4 * w4), out.shape
    assert bool(jnp.all(jnp.isfinite(out)))
    print("KERNEL_OK")
</pallas_src>

<mosaic_0001>
module attributes {stable_mosaic.version = 11 : i64} {
  func.func @_conv3x3_bn_selu_kernel(%arg0: memref<32x806xbf16, #tpu.memory_space<vmem>>, %arg1: memref<16x288xbf16, #tpu.memory_space<vmem>>, %arg2: memref<1x768xf32, #tpu.memory_space<vmem>>, %arg3: memref<16x1xf32, #tpu.memory_space<vmem>>, %arg4: memref<16x1xf32, #tpu.memory_space<vmem>>, %arg5: memref<16x768xf32, #tpu.memory_space<vmem>>, %arg6: memref<288x768xbf16, #tpu.memory_space<vmem>>) attributes {dimension_semantics = [], scalar_prefetch = 0 : i64, scratch_operands = 1 : i64, tpu.core_type = #tpu.core_type<tc>} {
    %c0 = arith.constant 0 : index
    %c0_0 = arith.constant 0 : index
    %0 = vector.load %arg0[%c0, %c0_0] : memref<32x806xbf16, #tpu.memory_space<vmem>>, vector<32x768xbf16>
    %c0_1 = arith.constant 0 : index
    %c0_2 = arith.constant 0 : index
    %1 = vector.load %arg6[%c0_1, %c0_2] : memref<288x768xbf16, #tpu.memory_space<vmem>>, vector<32x768xbf16>
    tpu.vector_store %arg6[%c0_1, %c0_2], %0 {strides = array<i32>} : memref<288x768xbf16, #tpu.memory_space<vmem>>, vector<32x768xbf16>,
    %c0_3 = arith.constant 0 : index
    %c1 = arith.constant 1 : index
    %2 = vector.load %arg0[%c0_3, %c1] : memref<32x806xbf16, #tpu.memory_space<vmem>>, vector<32x768xbf16>
    %c32 = arith.constant 32 : index
    %c0_4 = arith.constant 0 : index
    %3 = vector.load %arg6[%c32, %c0_4] : memref<288x768xbf16, #tpu.memory_space<vmem>>, vector<32x768xbf16>
    tpu.vector_store %arg6[%c32, %c0_4], %2 {strides = array<i32>} : memref<288x768xbf16, #tpu.memory_space<vmem>>, vector<32x768xbf16>,
    %c0_5 = arith.constant 0 : index
    %c2 = arith.constant 2 : index
    %4 = vector.load %arg0[%c0_5, %c2] : memref<32x806xbf16, #tpu.memory_space<vmem>>, vector<32x768xbf16>
    %c64 = arith.constant 64 : index
    %c0_6 = arith.constant 0 : index
    %5 = vector.load %arg6[%c64, %c0_6] : memref<288x768xbf16, #tpu.memory_space<vmem>>, vector<32x768xbf16>
    tpu.vector_store %arg6[%c64, %c0_6], %4 {strides = array<i32>} : memref<288x768xbf16, #tpu.memory_space<vmem>>, vector<32x768xbf16>,
    %c0_7 = arith.constant 0 : index
    %c18 = arith.constant 18 : index
    %6 = vector.load %arg0[%c0_7, %c18] : memref<32x806xbf16, #tpu.memory_space<vmem>>, vector<32x768xbf16>
    %c96 = arith.constant 96 : index
    %c0_8 = arith.constant 0 : index
    %7 = vector.load %arg6[%c96, %c0_8] : memref<288x768xbf16, #tpu.memory_space<vmem>>, vector<32x768xbf16>
    tpu.vector_store %arg6[%c96, %c0_8], %6 {strides = array<i32>} : memref<288x768xbf16, #tpu.memory_space<vmem>>, vector<32x768xbf16>,
    %c0_9 = arith.constant 0 : index
    %c19 = arith.constant 19 : index
    %8 = vector.load %arg0[%c0_9, %c19] : memref<32x806xbf16, #tpu.memory_space<vmem>>, vector<32x768xbf16>
    %c128 = arith.constant 128 : index
    %c0_10 = arith.constant 0 : index
    %9 = vector.load %arg6[%c128, %c0_10] : memref<288x768xbf16, #tpu.memory_space<vmem>>, vector<32x768xbf16>
    tpu.vector_store %arg6[%c128, %c0_10], %8 {strides = array<i32>} : memref<288x768xbf16, #tpu.memory_space<vmem>>, vector<32x768xbf16>,
    %c0_11 = arith.constant 0 : index
    %c20 = arith.constant 20 : index
    %10 = vector.load %arg0[%c0_11, %c20] : memref<32x806xbf16, #tpu.memory_space<vmem>>, vector<32x768xbf16>
    %c160 = arith.constant 160 : index
    %c0_12 = arith.constant 0 : index
    %11 = vector.load %arg6[%c160, %c0_12] : memref<288x768xbf16, #tpu.memory_space<vmem>>, vector<32x768xbf16>
    tpu.vector_store %arg6[%c160, %c0_12], %10 {strides = array<i32>} : memref<288x768xbf16, #tpu.memory_space<vmem>>, vector<32x768xbf16>,
    %c0_13 = arith.constant 0 : index
    %c36 = arith.constant 36 : index
    %12 = vector.load %arg0[%c0_13, %c36] : memref<32x806xbf16, #tpu.memory_space<vmem>>, vector<32x768xbf16>
    %c192 = arith.constant 192 : index
    %c0_14 = arith.constant 0 : index
    %13 = vector.load %arg6[%c192, %c0_14] : memref<288x768xbf16, #tpu.memory_space<vmem>>, vector<32x768xbf16>
    tpu.vector_store %arg6[%c192, %c0_14], %12 {strides = array<i32>} : memref<288x768xbf16, #tpu.memory_space<vmem>>, vector<32x768xbf16>,
    %c0_15 = arith.constant 0 : index
    %c37 = arith.constant 37 : index
    %14 = vector.load %arg0[%c0_15, %c37] : memref<32x806xbf16, #tpu.memory_space<vmem>>, vector<32x768xbf16>
    %c224 = arith.constant 224 : index
    %c0_16 = arith.constant 0 : index
    %15 = vector.load %arg6[%c224, %c0_16] : memref<288x768xbf16, #tpu.memory_space<vmem>>, vector<32x768xbf16>
    tpu.vector_store %arg6[%c224, %c0_16], %14 {strides = array<i32>} : memref<288x768xbf16, #tpu.memory_space<vmem>>, vector<32x768xbf16>,
    %c0_17 = arith.constant 0 : index
    %c38 = arith.constant 38 : index
    %16 = vector.load %arg0[%c0_17, %c38] : memref<32x806xbf16, #tpu.memory_space<vmem>>, vector<32x768xbf16>
    %c256 = arith.constant 256 : index
    %c0_18 = arith.constant 0 : index
    %17 = vector.load %arg6[%c256, %c0_18] : memref<288x768xbf16, #tpu.memory_space<vmem>>, vector<32x768xbf16>
    tpu.vector_store %arg6[%c256, %c0_18], %16 {strides = array<i32>} : memref<288x768xbf16, #tpu.memory_space<vmem>>, vector<32x768xbf16>,
    %c0_19 = arith.constant 0 : index
    %c0_20 = arith.constant 0 : index
    %18 = vector.load %arg1[%c0_19, %c0_20] : memref<16x288xbf16, #tpu.memory_space<vmem>>, vector<16x288xbf16>
    %c0_21 = arith.constant 0 : index
    %c0_22 = arith.constant 0 : index
    %19 = vector.load %arg6[%c0_21, %c0_22] : memref<288x768xbf16, #tpu.memory_space<vmem>>, vector<288x768xbf16>
    %cst = arith.constant dense<0.000000e+00> : vector<16x768xf32>
    %20 = tpu.matmul %18, %19, %cst {dimension_numbers = #tpu.dot_dimension_numbers<[1], [0], [0], [1], [0, 0, 1, 1], [], []>} : vector<16x288xbf16>, vector<288x768xbf16>, vector<16x768xf32> -> vector<16x768xf32>
    %c0_23 = arith.constant 0 : index
    %c0_24 = arith.constant 0 : index
    %21 = vector.load %arg2[%c0_23, %c0_24] : memref<1x768xf32, #tpu.memory_space<vmem>>, vector<1x768xf32>
    %22 = vector.broadcast %21 : vector<1x768xf32> to vector<16x768xf32>
    %23 = arith.mulf %20, %22 : vector<16x768xf32>
    %cst_25 = arith.constant dense<0.000000e+00> : vector<16xf32>
    %24 = vector.multi_reduction <add>, %23, %cst_25 [1] : vector<16x768xf32> to vector<16xf32>
    %25 = vector.shape_cast %24 : vector<16xf32> to vector<16x1xf32>
    %26 = arith.mulf %23, %23 : vector<16x768xf32>
    %cst_26 = arith.constant dense<0.000000e+00> : vector<16xf32>
    %27 = vector.multi_reduction <add>, %26, %cst_26 [1] : vector<16x768xf32> to vector<16xf32>
    %28 = vector.shape_cast %27 : vector<16xf32> to vector<16x1xf32>
    %cst_27 = arith.constant 0.001953125 : f32
    %29 = vector.broadcast %cst_27 : f32 to vector<16x1xf32>
    %30 = arith.mulf %25, %29 : vector<16x1xf32>
    %cst_28 = arith.constant 0.001953125 : f32
    %31 = vector.broadcast %cst_28 : f32 to vector<16x1xf32>
    %32 = arith.mulf %28, %31 : vector<16x1xf32>
    %33 = arith.mulf %30, %30 : vector<16x1xf32>
    %34 = arith.subf %32, %33 : vector<16x1xf32>
    %cst_29 = arith.constant 0.000000e+00 : f32
    %35 = vector.broadcast %cst_29 : f32 to vector<16x1xf32>
    %36 = arith.maximumf %34, %35 : vector<16x1xf32>
    %c0_30 = arith.constant 0 : index
    %c0_31 = arith.constant 0 : index
    %37 = vector.load %arg3[%c0_30, %c0_31] : memref<16x1xf32, #tpu.memory_space<vmem>>, vector<16x1xf32>
    %cst_32 = arith.constant 9.99999974E-6 : f32
    %38 = vector.broadcast %cst_32 : f32 to vector<16x1xf32>
    %39 = arith.addf %36, %38 : vector<16x1xf32>
    %40 = math.rsqrt %39 : vector<16x1xf32>
    %41 = arith.mulf %37, %40 : vector<16x1xf32>
    %c0_33 = arith.constant 0 : index
    %c0_34 = arith.constant 0 : index
    %42 = vector.load %arg4[%c0_33, %c0_34] : memref<16x1xf32, #tpu.memory_space<vmem>>, vector<16x1xf32>
    %43 = arith.mulf %30, %41 : vector<16x1xf32>
    %44 = arith.subf %42, %43 : vector<16x1xf32>
    %45 = vector.broadcast %41 : vector<16x1xf32> to vector<16x768xf32>
    %46 = arith.mulf %20, %45 : vector<16x768xf32>
    %47 = vector.broadcast %44 : vector<16x1xf32> to vector<16x768xf32>
    %48 = arith.addf %46, %47 : vector<16x768xf32>
    %cst_35 = arith.constant 0.000000e+00 : f32
    %49 = vector.broadcast %cst_35 : f32 to vector<16x768xf32>
    %50 = arith.cmpf ogt, %48, %49 : vector<16x768xf32>
    %51 = math.exp %48 : vector<16x768xf32>
    %cst_36 = arith.constant 1.000000e+00 : f32
    %52 = vector.broadcast %cst_36 : f32 to vector<16x768xf32>
    %53 = arith.subf %51, %52 : vector<16x768xf32>
    %cst_37 = arith.constant 1.67326319 : f32
    %54 = vector.broadcast %cst_37 : f32 to vector<16x768xf32>
    %55 = arith.mulf %54, %53 : vector<16x768xf32>
    %56 = arith.select %50, %48, %55 : vector<16x768xi1>, vector<16x768xf32>
    %cst_38 = arith.constant 1.05070102 : f32
    %57 = vector.broadcast %cst_38 : f32 to vector<16x768xf32>
    %58 = arith.mulf %57, %56 : vector<16x768xf32>
    %c0_39 = arith.constant 0 : index
    %c0_40 = arith.constant 0 : index
    %59 = vector.load %arg5[%c0_39, %c0_40] : memref<16x768xf32, #tpu.memory_space<vmem>>, vector<16x768xf32>
    tpu.vector_store %arg5[%c0_39, %c0_40], %58 {strides = array<i32>} : memref<16x768xf32, #tpu.memory_space<vmem>>, vector<16x768xf32>,
    return
  }
}

</mosaic_0001>

<llo_original>
// kernel: tpu_custom_call.1
$region0: #{tpu_custom_call.1}
  #allocation0 [shape = 'u32[]', space=smem, size = 0x4, offset = 0x4, fixed_abs, tag = 'smem constant byte address 0x4 - core index']
  #allocation1 [shape = 'u32[144,128]{1,0:T(1,128)}', space=vmem, size = 0x12000, scoped, tag = 'internal scratch']
  #allocation2 [shape = 'bf16[288,768]{1,0:T(16,128)(2,1)}', space=vmem, size = 0x6c000, scoped, tag = 'scratch operand']
  %s0 = inlined_call_operand.hbm [shape: bf16[32,806], index: 0, kind: input, shape index: {}]
  %s1 = inlined_call_operand.vmem [shape: bf16[16,288], index: 1, kind: input, shape index: {}]
  %s2 = inlined_call_operand.vmem [shape: f32[1,768], index: 2, kind: input, shape index: {}]
  %s3 = inlined_call_operand.vmem [shape: f32[16,1], index: 3, kind: input, shape index: {}]
  %s4 = inlined_call_operand.vmem [shape: f32[16,1], index: 4, kind: input, shape index: {}]
  %s5 = inlined_call_operand.hbm [shape: f32[16,768], index: 5, kind: output, shape index: {}]
  %s6 = sld [smem:[#allocation0]]
  $region34: #{tpu_custom_call.1} parent=0
    _
  %s8 = ssub.s32 1, %s6
  %s9 = scalar_select 0, %s8, %s6
  $region1: #{tpu_custom_call.1} parent=0
    #allocation3 [shape = 'u8[57344]{0}', space=vmem, size = 0xe000, scoped, tag = 'input window, operand 0, single buffered']
    #allocation4 [shape = 's32[1]{0}', space=sflag, size = 0x4, scoped, tag = 'scoped memory for tpu_custom_call.1']
    #allocation5 [shape = 's32[1]{0}', space=sflag, size = 0x4, scoped, tag = 'scoped memory for tpu_custom_call.1']
    #allocation6 [shape = 'u8[49152]{0}', space=vmem, size = 0xc000, scoped, tag = 'output window, operand 0, single buffered']
    %10 = vsyncpa [#allocation4], 0
    %11 = vsyncpa [#allocation5], 0
    // Predicated region
    $region2: #{tpu_custom_call.1} parent=1 // pred_check
      _
    $region3: #{tpu_custom_call.1} parent=1 // pred_check_branch
      %13 = sbr.rel (0) target = $region5
    $region4: #{tpu_custom_call.1} parent=1 // pred_region
      %s15 = ssub.s32 1792, 1792
      %16 = vsyncadd [#allocation4], %s15
      %s17 = sshll.u32 [#allocation3], 4
      %s18 = int_to_ptr.vmem [resolvable:$true] %s17
      %23 = dma.hbm_to_vmem [thread:$0]  %s0, 1792, %s18, [#allocation4], 448, 448, 28
    $region5: #{tpu_custom_call.1} parent=1 // pred_fallthru
      _
    // Predicated region
    $region6: #{tpu_custom_call.1} parent=1 // pred_check
      _
    $region7: #{tpu_custom_call.1} parent=1 // pred_check_branch
      %25 = sbr.rel (0) target = $region9
    $region8: #{tpu_custom_call.1} parent=1 // pred_region
      _
    $region9: #{tpu_custom_call.1} parent=1 // pred_fallthru
      _
    // Predicated region
    $region10: #{tpu_custom_call.1} parent=1 // pred_check
      _
    $region11: #{tpu_custom_call.1} parent=1 // pred_check_branch
      %27 = sbr.rel (0) target = $region13
    $region12: #{tpu_custom_call.1} parent=1 // pred_region
      _
    $region13: #{tpu_custom_call.1} parent=1 // pred_fallthru
      _
    // Predicated region
    $region14: #{tpu_custom_call.1} parent=1 // pred_check
      _
    $region15: #{tpu_custom_call.1} parent=1 // pred_check_branch
      %29 = sbr.rel (0) target = $region17
    $region16: #{tpu_custom_call.1} parent=1 // pred_region
      _
    $region17: #{tpu_custom_call.1} parent=1 // pred_fallthru
      _
    // Predicated region
    $region18: #{tpu_custom_call.1} parent=1 // pred_check
      _
    $region19: #{tpu_custom_call.1} parent=1 // pred_check_branch
      %31 = sbr.rel (0) target = $region21
    $region20: #{tpu_custom_call.1} parent=1 // pred_region
      _
    $region21: #{tpu_custom_call.1} parent=1 // pred_fallthru
      _
    // Predicated region
    $region22: #{tpu_custom_call.1} parent=1 // pred_check
      _
    $region23: #{tpu_custom_call.1} parent=1 // pred_check_branch
      %33 = sbr.rel (0) target = $region25
    $region24: #{tpu_custom_call.1} parent=1 // pred_region
      %34 = dma.done [#allocation4], 1792
    $region25: #{tpu_custom_call.1} parent=1 // pred_fallthru
      _
    %v36 = vld [vmem:[#allocation3] sm:$0xff]
    %v37 = vld [vmem:[#allocation3 + $0x8] sm:$0xff]
    %v38 = vld [vmem:[#allocation3 + $0x10] sm:$0xff]
    %v39 = vld [vmem:[#allocation3 + $0x1c] sm:$0xff]
    %v40 = vld [vmem:[#allocation3 + $0x24] sm:$0xff]
    %v41 = vld [vmem:[#allocation3 + $0x2c] sm:$0xff]
    %v42 = vld [vmem:[#allocation3 + $0x38] sm:$0xff]
    %v43 = vld [vmem:[#allocation3 + $0x40] sm:$0xff]
    %v44 = vld [vmem:[#allocation3 + $0x48] sm:$0xff]
    %v45 = vld [vmem:[#allocation3 + $0x54] sm:$0xff]
    %v46 = vld [vmem:[#allocation3 + $0x5c] sm:$0xff]
    %v47 = vld [vmem:[#allocation3 + $0x64] sm:$0xff]
    %v60 = vunpack.c.l.b16 %v36
    %v61 = vunpack.c.h.b16 %v36
    %v62 = vunpack.c.l.b16 %v37
    %v63 = vunpack.c.h.b16 %v37
    %v64 = vunpack.c.l.b16 %v38
    %v65 = vunpack.c.h.b16 %v38
    %v66 = vunpack.c.l.b16 %v39
    %v67 = vunpack.c.h.b16 %v39
    %v68 = vunpack.c.l.b16 %v40
    %v69 = vunpack.c.h.b16 %v40
    %v70 = vunpack.c.l.b16 %v41
    %v71 = vunpack.c.h.b16 %v41
    %v72 = vunpack.c.l.b16 %v42
    %v73 = vunpack.c.h.b16 %v42
    %v74 = vunpack.c.l.b16 %v43
    %v75 = vunpack.c.h.b16 %v43
    %v76 = vunpack.c.l.b16 %v44
    %v77 = vunpack.c.h.b16 %v44
    %v78 = vunpack.c.l.b16 %v45
    %v79 = vunpack.c.h.b16 %v45
    %v80 = vunpack.c.l.b16 %v46
    %v81 = vunpack.c.h.b16 %v46
    %v82 = vunpack.c.l.b16 %v47
    %v83 = vunpack.c.h.b16 %v47
    %v84 = vpack.c.b16 %v66, %v60
    %v85 = vpack.c.b16 %v67, %v61
    %v86 = vpack.c.b16 %v68, %v62
    %v87 = vpack.c.b16 %v69, %v63
    %v88 = vpack.c.b16 %v70, %v64
    %v89 = vpack.c.b16 %v71, %v65
    %v90 = vpack.c.b16 %v78, %v72
    %v91 = vpack.c.b16 %v79, %v73
    %v92 = vpack.c.b16 %v80, %v74
    %v93 = vpack.c.b16 %v81, %v75
    %v94 = vpack.c.b16 %v82, %v76
    %v95 = vpack.c.b16 %v83, %v77
    %108 = vst [vmem:[#allocation2] sm:$0xff] %v84
    %109 = vst [vmem:[#allocation2 + $0x8] sm:$0xff] %v85
    %110 = vst [vmem:[#allocation2 + $0x10] sm:$0xff] %v86
    %111 = vst [vmem:[#allocation2 + $0x18] sm:$0xff] %v87
    %112 = vst [vmem:[#allocation2 + $0x20] sm:$0xff] %v88
    %113 = vst [vmem:[#allocation2 + $0x28] sm:$0xff] %v89
    %114 = vst [vmem:[#allocation2 + $0x30] sm:$0xff] %v90
    %115 = vst [vmem:[#allocation2 + $0x38] sm:$0xff] %v91
    %116 = vst [vmem:[#allocation2 + $0x40] sm:$0xff] %v92
    %117 = vst [vmem:[#allocation2 + $0x48] sm:$0xff] %v93
    %118 = vst [vmem:[#allocation2 + $0x50] sm:$0xff] %v94
    %119 = vst [vmem:[#allocation2 + $0x58] sm:$0xff] %v95
    %v120 = vld [vmem:[#allocation3] sm:$0xff]
    %v121 = vld [vmem:[#allocation3 + $0x8] sm:$0xff]
    %v122 = vld [vmem:[#allocation3 + $0x10] sm:$0xff]
    %v123 = vld [vmem:[#allocation3 + $0x18] sm:$0xf]
    %v124 = vld [vmem:[#allocation3 + $0x1c] sm:$0xff]
    %v125 = vld [vmem:[#allocation3 + $0x24] sm:$0xff]
    %v126 = vld [vmem:[#allocation3 + $0x2c] sm:$0xff]
    %v127 = vld [vmem:[#allocation3 + $0x34] sm:$0xf]
    %v128 = vld [vmem:[#allocation3 + $0x38] sm:$0xff]
    %v129 = vld [vmem:[#allocation3 + $0x40] sm:$0xff]
    %v130 = vld [vmem:[#allocation3 + $0x48] sm:$0xff]
    %v131 = vld [vmem:[#allocation3 + $0x50] sm:$0xf]
    %v132 = vld [vmem:[#allocation3 + $0x54] sm:$0xff]
    %v133 = vld [vmem:[#allocation3 + $0x5c] sm:$0xff]
    %v134 = vld [vmem:[#allocation3 + $0x64] sm:$0xff]
    %v135 = vld [vmem:[#allocation3 + $0x6c] sm:$0xf]
    %v152 = vunpack.c.l.b16 %v120
    %v153 = vunpack.c.h.b16 %v120
    %v154 = vunpack.c.l.b16 %v121
    %v155 = vunpack.c.h.b16 %v121
    %v156 = vunpack.c.l.b16 %v122
    %v157 = vunpack.c.h.b16 %v122
    %v158 = vunpack.c.l.b16 %v123
    %v159 = vunpack.c.l.b16 %v124
    %v160 = vunpack.c.h.b16 %v124
    %v161 = vunpack.c.l.b16 %v125
    %v162 = vunpack.c.h.b16 %v125
    %v163 = vunpack.c.l.b16 %v126
    %v164 = vunpack.c.h.b16 %v126
    %v165 = vunpack.c.l.b16 %v127
    %v166 = vunpack.c.l.b16 %v128
    %v167 = vunpack.c.h.b16 %v128
    %v168 = vunpack.c.l.b16 %v129
    %v169 = vunpack.c.h.b16 %v129
    %v170 = vunpack.c.l.b16 %v130
    %v171 = vunpack.c.h.b16 %v130
    %v172 = vunpack.c.l.b16 %v131
    %v173 = vunpack.c.l.b16 %v132
    %v174 = vunpack.c.h.b16 %v132
    %v175 = vunpack.c.l.b16 %v133
    %v176 = vunpack.c.h.b16 %v133
    %v177 = vunpack.c.l.b16 %v134
    %v178 = vunpack.c.h.b16 %v134
    %v179 = vunpack.c.l.b16 %v135
    %v180 = vpack.c.b16 %v159, %v152
    %v181 = vpack.c.b16 %v160, %v153
    %v182 = vpack.c.b16 %v161, %v154
    %v183 = vpack.c.b16 %v162, %v155
    %v184 = vpack.c.b16 %v163, %v156
    %v185 = vpack.c.b16 %v164, %v157
    %v186 = vpack.c.b16 %v165, %v158
    %v187 = vpack.c.b16 %v173, %v166
    %v188 = vpack.c.b16 %v174, %v167
    %v189 = vpack.c.b16 %v175, %v168
    %v190 = vpack.c.b16 %v176, %v169
    %v191 = vpack.c.b16 %v177, %v170
    %v192 = vpack.c.b16 %v178, %v171
    %v193 = vpack.c.b16 %v179, %v172
    %194 = vrot.lane.b32.xlu0 %v180, 127
    %v195 = vpop.permute.xlu0 %194
    %196 = vrot.lane.b32.xlu0 %v181, 127
    %v197 = vpop.permute.xlu0 %196
    %198 = vrot.lane.b32.xlu0 %v182, 127
    %v199 = vpop.permute.xlu0 %198
    %200 = vrot.lane.b32.xlu0 %v183, 127
    %v201 = vpop.permute.xlu0 %200
    %202 = vrot.lane.b32.xlu0 %v184, 127
    %v203 = vpop.permute.xlu0 %202
    %204 = vrot.lane.b32.xlu0 %v185, 127
    %v205 = vpop.permute.xlu0 %204
    %206 = vrot.lane.b32.xlu0 %v186, 127
    %v207 = vpop.permute.xlu0 %206
    %208 = vrot.lane.b32.xlu0 %v187, 127
    %v209 = vpop.permute.xlu0 %208
    %210 = vrot.lane.b32.xlu0 %v188, 127
    %v211 = vpop.permute.xlu0 %210
    %212 = vrot.lane.b32.xlu0 %v189, 127
    %v213 = vpop.permute.xlu0 %212
    %214 = vrot.lane.b32.xlu0 %v190, 127
    %v215 = vpop.permute.xlu0 %214
    %216 = vrot.lane.b32.xlu0 %v191, 127
    %v217 = vpop.permute.xlu0 %216
    %218 = vrot.lane.b32.xlu0 %v192, 127
    %v219 = vpop.permute.xlu0 %218
    %220 = vrot.lane.b32.xlu0 %v193, 127
    %v221 = vpop.permute.xlu0 %220
    %vm222 = vcmask 1039360
    %v223 = vsel %vm222, %v195, %v197
    %v224 = vsel %vm222, %v197, %v199
    %v225 = vsel %vm222, %v199, %v201
    %v226 = vsel %vm222, %v201, %v203
    %v227 = vsel %vm222, %v203, %v205
    %v228 = vsel %vm222, %v205, %v207
    %v229 = vsel %vm222, %v209, %v211
    %v230 = vsel %vm222, %v211, %v213
    %v231 = vsel %vm222, %v213, %v215
    %v232 = vsel %vm222, %v215, %v217
    %v233 = vsel %vm222, %v217, %v219
    %v234 = vsel %vm222, %v219, %v221
    %247 = vst [vmem:[#allocation2 + $0x60] sm:$0xff] %v223
    %248 = vst [vmem:[#allocation2 + $0x68] sm:$0xff] %v224
    %249 = vst [vmem:[#allocation2 + $0x70] sm:$0xff] %v225
    %250 = vst [vmem:[#allocation2 + $0x78] sm:$0xff] %v226
    %251 = vst [vmem:[#allocation2 + $0x80] sm:$0xff] %v227
    %252 = vst [vmem:[#allocation2 + $0x88] sm:$0xff] %v228
    %253 = vst [vmem:[#allocation2 + $0x90] sm:$0xff] %v229
    %254 = vst [vmem:[#allocation2 + $0x98] sm:$0xff] %v230
    %255 = vst [vmem:[#allocation2 + $0xa0] sm:$0xff] %v231
    %256 = vst [vmem:[#allocation2 + $0xa8] sm:$0xff] %v232
    %257 = vst [vmem:[#allocation2 + $0xb0] sm:$0xff] %v233
    %258 = vst [vmem:[#allocation2 + $0xb8] sm:$0xff] %v234
    %v259 = vld [vmem:[#allocation3] sm:$0xff]
    %v260 = vld [vmem:[#allocation3 + $0x8] sm:$0xff]
    %v261 = vld [vmem:[#allocation3 + $0x10] sm:$0xff]
    %v262 = vld [vmem:[#allocation3 + $0x18] sm:$0xf]
    %v263 = vld [vmem:[#allocation3 + $0x1c] sm:$0xff]
    %v264 = vld [vmem:[#allocation3 + $0x24] sm:$0xff]
    %v265 = vld [vmem:[#allocation3 + $0x2c] sm:$0xff]
    %v266 = vld [vmem:[#allocation3 + $0x34] sm:$0xf]
    %v267 = vld [vmem:[#allocation3 + $0x38] sm:$0xff]
    %v268 = vld [vmem:[#allocation3 + $0x40] sm:$0xff]
    %v269 = vld [vmem:[#allocation3 + $0x48] sm:$0xff]
    %v270 = vld [vmem:[#allocation3 + $0x50] sm:$0xf]
    %v271 = vld [vmem:[#allocation3 + $0x54] sm:$0xff]
    %v272 = vld [vmem:[#allocation3 + $0x5c] sm:$0xff]
    %v273 = vld [vmem:[#allocation3 + $0x64] sm:$0xff]
    %v274 = vld [vmem:[#allocation3 + $0x6c] sm:$0xf]
    %v291 = vunpack.c.l.b16 %v259
    %v292 = vunpack.c.h.b16 %v259
    %v293 = vunpack.c.l.b16 %v260
    %v294 = vunpack.c.h.b16 %v260
    %v295 = vunpack.c.l.b16 %v261
    %v296 = vunpack.c.h.b16 %v261
    %v297 = vunpack.c.l.b16 %v262
    %v298 = vunpack.c.l.b16 %v263
    %v299 = vunpack.c.h.b16 %v263
    %v300 = vunpack.c.l.b16 %v264
    %v301 = vunpack.c.h.b16 %v264
    %v302 = vunpack.c.l.b16 %v265
    %v303 = vunpack.c.h.b16 %v265
    %v304 = vunpack.c.l.b16 %v266
    %v305 = vunpack.c.l.b16 %v267
    %v306 = vunpack.c.h.b16 %v267
    %v307 = vunpack.c.l.b16 %v268
    %v308 = vunpack.c.h.b16 %v268
    %v309 = vunpack.c.l.b16 %v269
    %v310 = vunpack.c.h.b16 %v269
    %v311 = vunpack.c.l.b16 %v270
    %v312 = vunpack.c.l.b16 %v271
    %v313 = vunpack.c.h.b16 %v271
    %v314 = vunpack.c.l.b16 %v272
    %v315 = vunpack.c.h.b16 %v272
    %v316 = vunpack.c.l.b16 %v273
    %v317 = vunpack.c.h.b16 %v273
    %v318 = vunpack.c.l.b16 %v274
    %v319 = vpack.c.b16 %v298, %v291
    %v320 = vpack.c.b16 %v299, %v292
    %v321 = vpack.c.b16 %v300, %v293
    %v322 = vpack.c.b16 %v301, %v294
    %v323 = vpack.c.b16 %v302, %v295
    %v324 = vpack.c.b16 %v303, %v296
    %v325 = vpack.c.b16 %v304, %v297
    %v326 = vpack.c.b16 %v312, %v305
    %v327 = vpack.c.b16 %v313, %v306
    %v328 = vpack.c.b16 %v314, %v307
    %v329 = vpack.c.b16 %v315, %v308
    %v330 = vpack.c.b16 %v316, %v309
    %v331 = vpack.c.b16 %v317, %v310
    %v332 = vpack.c.b16 %v318, %v311
    %333 = vrot.lane.b32.xlu0 %v319, 126
    %v334 = vpop.permute.xlu0 %333
    %335 = vrot.lane.b32.xlu0 %v320, 126
    %v336 = vpop.permute.xlu0 %335
    %337 = vrot.lane.b32.xlu0 %v321, 126
    %v338 = vpop.permute.xlu0 %337
    %339 = vrot.lane.b32.xlu0 %v322, 126
    %v340 = vpop.permute.xlu0 %339
    %341 = vrot.lane.b32.xlu0 %v323, 126
    %v342 = vpop.permute.xlu0 %341
    %343 = vrot.lane.b32.xlu0 %v324, 126
    %v344 = vpop.permute.xlu0 %343
    %345 = vrot.lane.b32.xlu0 %v325, 126
    %v346 = vpop.permute.xlu0 %345
    %347 = vrot.lane.b32.xlu0 %v326, 126
    %v348 = vpop.permute.xlu0 %347
    %349 = vrot.lane.b32.xlu0 %v327, 126
    %v350 = vpop.permute.xlu0 %349
    %351 = vrot.lane.b32.xlu0 %v328, 126
    %v352 = vpop.permute.xlu0 %351
    %353 = vrot.lane.b32.xlu0 %v329, 126
    %v354 = vpop.permute.xlu0 %353
    %355 = vrot.lane.b32.xlu0 %v330, 126
    %v356 = vpop.permute.xlu0 %355
    %357 = vrot.lane.b32.xlu0 %v331, 126
    %v358 = vpop.permute.xlu0 %357
    %359 = vrot.lane.b32.xlu0 %v332, 126
    %v360 = vpop.permute.xlu0 %359
    %vm361 = vcmask 1031168
    %v362 = vsel %vm361, %v334, %v336
    %v363 = vsel %vm361, %v336, %v338
    %v364 = vsel %vm361, %v338, %v340
    %v365 = vsel %vm361, %v340, %v342
    %v366 = vsel %vm361, %v342, %v344
    %v367 = vsel %vm361, %v344, %v346
    %v368 = vsel %vm361, %v348, %v350
    %v369 = vsel %vm361, %v350, %v352
    %v370 = vsel %vm361, %v352, %v354
    %v371 = vsel %vm361, %v354, %v356
    %v372 = vsel %vm361, %v356, %v358
    %v373 = vsel %vm361, %v358, %v360
    %386 = vst [vmem:[#allocation2 + $0xc0] sm:$0xff] %v362
    %387 = vst [vmem:[#allocation2 + $0xc8] sm:$0xff] %v363
    %388 = vst [vmem:[#allocation2 + $0xd0] sm:$0xff] %v364
    %389 = vst [vmem:[#allocation2 + $0xd8] sm:$0xff] %v365
    %390 = vst [vmem:[#allocation2 + $0xe0] sm:$0xff] %v366
    %391 = vst [vmem:[#allocation2 + $0xe8] sm:$0xff] %v367
    %392 = vst [vmem:[#allocation2 + $0xf0] sm:$0xff] %v368
    %393 = vst [vmem:[#allocation2 + $0xf8] sm:$0xff] %v369
    %394 = vst [vmem:[#allocation2 + $0x100] sm:$0xff] %v370
    %395 = vst [vmem:[#allocation2 + $0x108] sm:$0xff] %v371
    %396 = vst [vmem:[#allocation2 + $0x110] sm:$0xff] %v372
    %397 = vst [vmem:[#allocation2 + $0x118] sm:$0xff] %v373
    %v398 = vld [vmem:[#allocation3] sm:$0xff]
    %v399 = vld [vmem:[#allocation3 + $0x8] sm:$0xff]
    %v400 = vld [vmem:[#allocation3 + $0x10] sm:$0xff]
    %v401 = vld [vmem:[#allocation3 + $0x18] sm:$0xf]
    %v402 = vld [vmem:[#allocation3 + $0x1c] sm:$0xff]
    %v403 = vld [vmem:[#allocation3 + $0x24] sm:$0xff]
    %v404 = vld [vmem:[#allocation3 + $0x2c] sm:$0xff]
    %v405 = vld [vmem:[#allocation3 + $0x34] sm:$0xf]
    %v406 = vld [vmem:[#allocation3 + $0x38] sm:$0xff]
    %v407 = vld [vmem:[#allocation3 + $0x40] sm:$0xff]
    %v408 = vld [vmem:[#allocation3 + $0x48] sm:$0xff]
    %v409 = vld [vmem:[#allocation3 + $0x50] sm:$0xf]
    %v410 = vld [vmem:[#allocation3 + $0x54] sm:$0xff]
    %v411 = vld [vmem:[#allocation3 + $0x5c] sm:$0xff]
    %v412 = vld [vmem:[#allocation3 + $0x64] sm:$0xff]
    %v413 = vld [vmem:[#allocation3 + $0x6c] sm:$0xf]
    %v430 = vunpack.c.l.b16 %v398
    %v431 = vunpack.c.h.b16 %v398
    %v432 = vunpack.c.l.b16 %v399
    %v433 = vunpack.c.h.b16 %v399
    %v434 = vunpack.c.l.b16 %v400
    %v435 = vunpack.c.h.b16 %v400
    %v436 = vunpack.c.l.b16 %v401
    %v437 = vunpack.c.l.b16 %v402
    %v438 = vunpack.c.h.b16 %v402
    %v439 = vunpack.c.l.b16 %v403
    %v440 = vunpack.c.h.b16 %v403
    %v441 = vunpack.c.l.b16 %v404
    %v442 = vunpack.c.h.b16 %v404
    %v443 = vunpack.c.l.b16 %v405
    %v444 = vunpack.c.l.b16 %v406
    %v445 = vunpack.c.h.b16 %v406
    %v446 = vunpack.c.l.b16 %v407
    %v447 = vunpack.c.h.b16 %v407
    %v448 = vunpack.c.l.b16 %v408
    %v449 = vunpack.c.h.b16 %v408
    %v450 = vunpack.c.l.b16 %v409
    %v451 = vunpack.c.l.b16 %v410
    %v452 = vunpack.c.h.b16 %v410
    %v453 = vunpack.c.l.b16 %v411
    %v454 = vunpack.c.h.b16 %v411
    %v455 = vunpack.c.l.b16 %v412
    %v456 = vunpack.c.h.b16 %v412
    %v457 = vunpack.c.l.b16 %v413
    %v458 = vpack.c.b16 %v437, %v430
    %v459 = vpack.c.b16 %v438, %v431
    %v460 = vpack.c.b16 %v439, %v432
    %v461 = vpack.c.b16 %v440, %v433
    %v462 = vpack.c.b16 %v441, %v434
    %v463 = vpack.c.b16 %v442, %v435
    %v464 = vpack.c.b16 %v443, %v436
    %v465 = vpack.c.b16 %v451, %v444
    %v466 = vpack.c.b16 %v452, %v445
    %v467 = vpack.c.b16 %v453, %v446
    %v468 = vpack.c.b16 %v454, %v447
    %v469 = vpack.c.b16 %v455, %v448
    %v470 = vpack.c.b16 %v456, %v449
    %v471 = vpack.c.b16 %v457, %v450
    %472 = vrot.lane.b32.xlu0 %v458, 110
    %v473 = vpop.permute.xlu0 %472
    %474 = vrot.lane.b32.xlu0 %v459, 110
    %v475 = vpop.permute.xlu0 %474
    %476 = vrot.lane.b32.xlu0 %v460, 110
    %v477 = vpop.permute.xlu0 %476
    %478 = vrot.lane.b32.xlu0 %v461, 110
    %v479 = vpop.permute.xlu0 %478
    %480 = vrot.lane.b32.xlu0 %v462, 110
    %v481 = vpop.permute.xlu0 %480
    %482 = vrot.lane.b32.xlu0 %v463, 110
    %v483 = vpop.permute.xlu0 %482
    %484 = vrot.lane.b32.xlu0 %v464, 110
    %v485 = vpop.permute.xlu0 %484
    %486 = vrot.lane.b32.xlu0 %v465, 110
    %v487 = vpop.permute.xlu0 %486
    %488 = vrot.lane.b32.xlu0 %v466, 110
    %v489 = vpop.permute.xlu0 %488
    %490 = vrot.lane.b32.xlu0 %v467, 110
    %v491 = vpop.permute.xlu0 %490
    %492 = vrot.lane.b32.xlu0 %v468, 110
    %v493 = vpop.permute.xlu0 %492
    %494 = vrot.lane.b32.xlu0 %v469, 110
    %v495 = vpop.permute.xlu0 %494
    %496 = vrot.lane.b32.xlu0 %v470, 110
    %v497 = vpop.permute.xlu0 %496
    %498 = vrot.lane.b32.xlu0 %v471, 110
    %v499 = vpop.permute.xlu0 %498
    %vm500 = vcmask 900096
    %v501 = vsel %vm500, %v473, %v475
    %v502 = vsel %vm500, %v475, %v477
    %v503 = vsel %vm500, %v477, %v479
    %v504 = vsel %vm500, %v479, %v481
    %v505 = vsel %vm500, %v481, %v483
    %v506 = vsel %vm500, %v483, %v485
    %v507 = vsel %vm500, %v487, %v489
    %v508 = vsel %vm500, %v489, %v491
    %v509 = vsel %vm500, %v491, %v493
    %v510 = vsel %vm500, %v493, %v495
    %v511 = vsel %vm500, %v495, %v497
    %v512 = vsel %vm500, %v497, %v499
    %525 = vst [vmem:[#allocation2 + $0x120] sm:$0xff] %v501
    %526 = vst [vmem:[#allocation2 + $0x128] sm:$0xff] %v502
    %527 = vst [vmem:[#allocation2 + $0x130] sm:$0xff] %v503
    %528 = vst [vmem:[#allocation2 + $0x138] sm:$0xff] %v504
    %529 = vst [vmem:[#allocation2 + $0x140] sm:$0xff] %v505
    %530 = vst [vmem:[#allocation2 + $0x148] sm:$0xff] %v506
    %531 = vst [vmem:[#allocation2 + $0x150] sm:$0xff] %v507
    %532 = vst [vmem:[#allocation2 + $0x158] sm:$0xff] %v508
    %533 = vst [vmem:[#allocation2 + $0x160] sm:$0xff] %v509
    %534 = vst [vmem:[#allocation2 + $0x168] sm:$0xff] %v510
    %535 = vst [vmem:[#allocation2 + $0x170] sm:$0xff] %v511
    %536 = vst [vmem:[#allocation2 + $0x178] sm:$0xff] %v512
    %v537 = vld [vmem:[#allocation3] sm:$0xff]
    %v538 = vld [vmem:[#allocation3 + $0x8] sm:$0xff]
    %v539 = vld [vmem:[#allocation3 + $0x10] sm:$0xff]
    %v540 = vld [vmem:[#allocation3 + $0x18] sm:$0xf]
    %v541 = vld [vmem:[#allocation3 + $0x1c] sm:$0xff]
    %v542 = vld [vmem:[#allocation3 + $0x24] sm:$0xff]
    %v543 = vld [vmem:[#allocation3 + $0x2c] sm:$0xff]
    %v544 = vld [vmem:[#allocation3 + $0x34] sm:$0xf]
    %v545 = vld [vmem:[#allocation3 + $0x38] sm:$0xff]
    %v546 = vld [vmem:[#allocation3 + $0x40] sm:$0xff]
    %v547 = vld [vmem:[#allocation3 + $0x48] sm:$0xff]
    %v548 = vld [vmem:[#allocation3 + $0x50] sm:$0xf]
    %v549 = vld [vmem:[#allocation3 + $0x54] sm:$0xff]
    %v550 = vld [vmem:[#allocation3 + $0x5c] sm:$0xff]
    %v551 = vld [vmem:[#allocation3 + $0x64] sm:$0xff]
    %v552 = vld [vmem:[#allocation3 + $0x6c] sm:$0xf]
    %v569 = vunpack.c.l.b16 %v537
    %v570 = vunpack.c.h.b16 %v537
    %v571 = vunpack.c.l.b16 %v538
    %v572 = vunpack.c.h.b16 %v538
    %v573 = vunpack.c.l.b16 %v539
    %v574 = vunpack.c.h.b16 %v539
    %v575 = vunpack.c.l.b16 %v540
    %v576 = vunpack.c.l.b16 %v541
    %v577 = vunpack.c.h.b16 %v541
    %v578 = vunpack.c.l.b16 %v542
    %v579 = vunpack.c.h.b16 %v542
    %v580 = vunpack.c.l.b16 %v543
    %v581 = vunpack.c.h.b16 %v543
    %v582 = vunpack.c.l.b16 %v544
    %v583 = vunpack.c.l.b16 %v545
    %v584 = vunpack.c.h.b16 %v545
    %v585 = vunpack.c.l.b16 %v546
    %v586 = vunpack.c.h.b16 %v546
    %v587 = vunpack.c.l.b16 %v547
    %v588 = vunpack.c.h.b16 %v547
    %v589 = vunpack.c.l.b16 %v548
    %v590 = vunpack.c.l.b16 %v549
    %v591 = vunpack.c.h.b16 %v549
    %v592 = vunpack.c.l.b16 %v550
    %v593 = vunpack.c.h.b16 %v550
    %v594 = vunpack.c.l.b16 %v551
    %v595 = vunpack.c.h.b16 %v551
    %v596 = vunpack.c.l.b16 %v552
    %v597 = vpack.c.b16 %v576, %v569
    %v598 = vpack.c.b16 %v577, %v570
    %v599 = vpack.c.b16 %v578, %v571
    %v600 = vpack.c.b16 %v579, %v572
    %v601 = vpack.c.b16 %v580, %v573
    %v602 = vpack.c.b16 %v581, %v574
    %v603 = vpack.c.b16 %v582, %v575
    %v604 = vpack.c.b16 %v590, %v583
    %v605 = vpack.c.b16 %v591, %v584
    %v606 = vpack.c.b16 %v592, %v585
    %v607 = vpack.c.b16 %v593, %v586
    %v608 = vpack.c.b16 %v594, %v587
    %v609 = vpack.c.b16 %v595, %v588
    %v610 = vpack.c.b16 %v596, %v589
    %611 = vrot.lane.b32.xlu0 %v597, 109
    %v612 = vpop.permute.xlu0 %611
    %613 = vrot.lane.b32.xlu0 %v598, 109
    %v614 = vpop.permute.xlu0 %613
    %615 = vrot.lane.b32.xlu0 %v599, 109
    %v616 = vpop.permute.xlu0 %615
    %617 = vrot.lane.b32.xlu0 %v600, 109
    %v618 = vpop.permute.xlu0 %617
    %619 = vrot.lane.b32.xlu0 %v601, 109
    %v620 = vpop.permute.xlu0 %619
    %621 = vrot.lane.b32.xlu0 %v602, 109
    %v622 = vpop.permute.xlu0 %621
    %623 = vrot.lane.b32.xlu0 %v603, 109
    %v624 = vpop.permute.xlu0 %623
    %625 = vrot.lane.b32.xlu0 %v604, 109
    %v626 = vpop.permute.xlu0 %625
    %627 = vrot.lane.b32.xlu0 %v605, 109
    %v628 = vpop.permute.xlu0 %627
    %629 = vrot.lane.b32.xlu0 %v606, 109
    %v630 = vpop.permute.xlu0 %629
    %631 = vrot.lane.b32.xlu0 %v607, 109
    %v632 = vpop.permute.xlu0 %631
    %633 = vrot.lane.b32.xlu0 %v608, 109
    %v634 = vpop.permute.xlu0 %633
    %635 = vrot.lane.b32.xlu0 %v609, 109
    %v636 = vpop.permute.xlu0 %635
    %637 = vrot.lane.b32.xlu0 %v610, 109
    %v638 = vpop.permute.xlu0 %637
    %vm639 = vcmask 891904
    %v640 = vsel %vm639, %v612, %v614
    %v641 = vsel %vm639, %v614, %v616
    %v642 = vsel %vm639, %v616, %v618
    %v643 = vsel %vm639, %v618, %v620
    %v644 = vsel %vm639, %v620, %v622
    %v645 = vsel %vm639, %v622, %v624
    %v646 = vsel %vm639, %v626, %v628
    %v647 = vsel %vm639, %v628, %v630
    %v648 = vsel %vm639, %v630, %v632
    %v649 = vsel %vm639, %v632, %v634
    %v650 = vsel %vm639, %v634, %v636
    %v651 = vsel %vm639, %v636, %v638
    %664 = vst [vmem:[#allocation2 + $0x180] sm:$0xff] %v640
    %665 = vst [vmem:[#allocation2 + $0x188] sm:$0xff] %v641
    %666 = vst [vmem:[#allocation2 + $0x190] sm:$0xff] %v642
    %667 = vst [vmem:[#allocation2 + $0x198] sm:$0xff] %v643
    %668 = vst [vmem:[#allocation2 + $0x1a0] sm:$0xff] %v644
    %669 = vst [vmem:[#allocation2 + $0x1a8] sm:$0xff] %v645
    %670 = vst [vmem:[#allocation2 + $0x1b0] sm:$0xff] %v646
    %671 = vst [vmem:[#allocation2 + $0x1b8] sm:$0xff] %v647
    %672 = vst [vmem:[#allocation2 + $0x1c0] sm:$0xff] %v648
    %673 = vst [vmem:[#allocation2 + $0x1c8] sm:$0xff] %v649
    %674 = vst [vmem:[#allocation2 + $0x1d0] sm:$0xff] %v650
    %675 = vst [vmem:[#allocation2 + $0x1d8] sm:$0xff] %v651
    %v676 = vld [vmem:[#allocation3] sm:$0xff]
    %v677 = vld [vmem:[#allocation3 + $0x8] sm:$0xff]
    %v678 = vld [vmem:[#allocation3 + $0x10] sm:$0xff]
    %v679 = vld [vmem:[#allocation3 + $0x18] sm:$0xf]
    %v680 = vld [vmem:[#allocation3 + $0x1c] sm:$0xff]
    %v681 = vld [vmem:[#allocation3 + $0x24] sm:$0xff]
    %v682 = vld [vmem:[#allocation3 + $0x2c] sm:$0xff]
    %v683 = vld [vmem:[#allocation3 + $0x34] sm:$0xf]
    %v684 = vld [vmem:[#allocation3 + $0x38] sm:$0xff]
    %v685 = vld [vmem:[#allocation3 + $0x40] sm:$0xff]
    %v686 = vld [vmem:[#allocation3 + $0x48] sm:$0xff]
    %v687 = vld [vmem:[#allocation3 + $0x50] sm:$0xf]
    %v688 = vld [vmem:[#allocation3 + $0x54] sm:$0xff]
    %v689 = vld [vmem:[#allocation3 + $0x5c] sm:$0xff]
    %v690 = vld [vmem:[#allocation3 + $0x64] sm:$0xff]
    %v691 = vld [vmem:[#allocation3 + $0x6c] sm:$0xf]
    %v708 = vunpack.c.l.b16 %v676
    %v709 = vunpack.c.h.b16 %v676
    %v710 = vunpack.c.l.b16 %v677
    %v711 = vunpack.c.h.b16 %v677
    %v712 = vunpack.c.l.b16 %v678
    %v713 = vunpack.c.h.b16 %v678
    %v714 = vunpack.c.l.b16 %v679
    %v715 = vunpack.c.l.b16 %v680
    %v716 = vunpack.c.h.b16 %v680
    %v717 = vunpack.c.l.b16 %v681
    %v718 = vunpack.c.h.b16 %v681
    %v719 = vunpack.c.l.b16 %v682
    %v720 = vunpack.c.h.b16 %v682
    %v721 = vunpack.c.l.b16 %v683
    %v722 = vunpack.c.l.b16 %v684
    %v723 = vunpack.c.h.b16 %v684
    %v724 = vunpack.c.l.b16 %v685
    %v725 = vunpack.c.h.b16 %v685
    %v726 = vunpack.c.l.b16 %v686
    %v727 = vunpack.c.h.b16 %v686
    %v728 = vunpack.c.l.b16 %v687
    %v729 = vunpack.c.l.b16 %v688
    %v730 = vunpack.c.h.b16 %v688
    %v731 = vunpack.c.l.b16 %v689
    %v732 = vunpack.c.h.b16 %v689
    %v733 = vunpack.c.l.b16 %v690
    %v734 = vunpack.c.h.b16 %v690
    %v735 = vunpack.c.l.b16 %v691
    %v736 = vpack.c.b16 %v715, %v708
    %v737 = vpack.c.b16 %v716, %v709
    %v738 = vpack.c.b16 %v717, %v710
    %v739 = vpack.c.b16 %v718, %v711
    %v740 = vpack.c.b16 %v719, %v712
    %v741 = vpack.c.b16 %v720, %v713
    %v742 = vpack.c.b16 %v721, %v714
    %v743 = vpack.c.b16 %v729, %v722
    %v744 = vpack.c.b16 %v730, %v723
    %v745 = vpack.c.b16 %v731, %v724
    %v746 = vpack.c.b16 %v732, %v725
    %v747 = vpack.c.b16 %v733, %v726
    %v748 = vpack.c.b16 %v734, %v727
    %v749 = vpack.c.b16 %v735, %v728
    %750 = vrot.lane.b32.xlu0 %v736, 108
    %v751 = vpop.permute.xlu0 %750
    %752 = vrot.lane.b32.xlu0 %v737, 108
    %v753 = vpop.permute.xlu0 %752
    %754 = vrot.lane.b32.xlu0 %v738, 108
    %v755 = vpop.permute.xlu0 %754
    %756 = vrot.lane.b32.xlu0 %v739, 108
    %v757 = vpop.permute.xlu0 %756
    %758 = vrot.lane.b32.xlu0 %v740, 108
    %v759 = vpop.permute.xlu0 %758
    %760 = vrot.lane.b32.xlu0 %v741, 108
    %v761 = vpop.permute.xlu0 %760
    %762 = vrot.lane.b32.xlu0 %v742, 108
    %v763 = vpop.permute.xlu0 %762
    %764 = vrot.lane.b32.xlu0 %v743, 108
    %v765 = vpop.permute.xlu0 %764
    %766 = vrot.lane.b32.xlu0 %v744, 108
    %v767 = vpop.permute.xlu0 %766
    %768 = vrot.lane.b32.xlu0 %v745, 108
    %v769 = vpop.permute.xlu0 %768
    %770 = vrot.lane.b32.xlu0 %v746, 108
    %v771 = vpop.permute.xlu0 %770
    %772 = vrot.lane.b32.xlu0 %v747, 108
    %v773 = vpop.permute.xlu0 %772
    %774 = vrot.lane.b32.xlu0 %v748, 108
    %v775 = vpop.permute.xlu0 %774
    %776 = vrot.lane.b32.xlu0 %v749, 108
    %v777 = vpop.permute.xlu0 %776
    %vm778 = vcmask 883712
    %v779 = vsel %vm778, %v751, %v753
    %v780 = vsel %vm778, %v753, %v755
    %v781 = vsel %vm778, %v755, %v757
    %v782 = vsel %vm778, %v757, %v759
    %v783 = vsel %vm778, %v759, %v761
    %v784 = vsel %vm778, %v761, %v763
    %v785 = vsel %vm778, %v765, %v767
    %v786 = vsel %vm778, %v767, %v769
    %v787 = vsel %vm778, %v769, %v771
    %v788 = vsel %vm778, %v771, %v773
    %v789 = vsel %vm778, %v773, %v775
    %v790 = vsel %vm778, %v775, %v777
    %803 = vst [vmem:[#allocation2 + $0x1e0] sm:$0xff] %v779
    %804 = vst [vmem:[#allocation2 + $0x1e8] sm:$0xff] %v780
    %805 = vst [vmem:[#allocation2 + $0x1f0] sm:$0xff] %v781
    %806 = vst [vmem:[#allocation2 + $0x1f8] sm:$0xff] %v782
    %807 = vst [vmem:[#allocation2 + $0x200] sm:$0xff] %v783
    %808 = vst [vmem:[#allocation2 + $0x208] sm:$0xff] %v784
    %809 = vst [vmem:[#allocation2 + $0x210] sm:$0xff] %v785
    %810 = vst [vmem:[#allocation2 + $0x218] sm:$0xff] %v786
    %811 = vst [vmem:[#allocation2 + $0x220] sm:$0xff] %v787
    %812 = vst [vmem:[#allocation2 + $0x228] sm:$0xff] %v788
    %813 = vst [vmem:[#allocation2 + $0x230] sm:$0xff] %v789
    %814 = vst [vmem:[#allocation2 + $0x238] sm:$0xff] %v790
    %v815 = vld [vmem:[#allocation3] sm:$0xff]
    %v816 = vld [vmem:[#allocation3 + $0x8] sm:$0xff]
    %v817 = vld [vmem:[#allocation3 + $0x10] sm:$0xff]
    %v818 = vld [vmem:[#allocation3 + $0x18] sm:$0xf]
    %v819 = vld [vmem:[#allocation3 + $0x1c] sm:$0xff]
    %v820 = vld [vmem:[#allocation3 + $0x24] sm:$0xff]
    %v821 = vld [vmem:[#allocation3 + $0x2c] sm:$0xff]
    %v822 = vld [vmem:[#allocation3 + $0x34] sm:$0xf]
    %v823 = vld [vmem:[#allocation3 + $0x38] sm:$0xff]
    %v824 = vld [vmem:[#allocation3 + $0x40] sm:$0xff]
    %v825 = vld [vmem:[#allocation3 + $0x48] sm:$0xff]
    %v826 = vld [vmem:[#allocation3 + $0x50] sm:$0xf]
    %v827 = vld [vmem:[#allocation3 + $0x54] sm:$0xff]
    %v828 = vld [vmem:[#allocation3 + $0x5c] sm:$0xff]
    %v829 = vld [vmem:[#allocation3 + $0x64] sm:$0xff]
    %v830 = vld [vmem:[#allocation3 + $0x6c] sm:$0xf]
    %v847 = vunpack.c.l.b16 %v815
    %v848 = vunpack.c.h.b16 %v815
    %v849 = vunpack.c.l.b16 %v816
    %v850 = vunpack.c.h.b16 %v816
    %v851 = vunpack.c.l.b16 %v817
    %v852 = vunpack.c.h.b16 %v817
    %v853 = vunpack.c.l.b16 %v818
    %v854 = vunpack.c.l.b16 %v819
    %v855 = vunpack.c.h.b16 %v819
    %v856 = vunpack.c.l.b16 %v820
    %v857 = vunpack.c.h.b16 %v820
    %v858 = vunpack.c.l.b16 %v821
    %v859 = vunpack.c.h.b16 %v821
    %v860 = vunpack.c.l.b16 %v822
    %v861 = vunpack.c.l.b16 %v823
    %v862 = vunpack.c.h.b16 %v823
    %v863 = vunpack.c.l.b16 %v824
    %v864 = vunpack.c.h.b16 %v824
    %v865 = vunpack.c.l.b16 %v825
    %v866 = vunpack.c.h.b16 %v825
    %v867 = vunpack.c.l.b16 %v826
    %v868 = vunpack.c.l.b16 %v827
    %v869 = vunpack.c.h.b16 %v827
    %v870 = vunpack.c.l.b16 %v828
    %v871 = vunpack.c.h.b16 %v828
    %v872 = vunpack.c.l.b16 %v829
    %v873 = vunpack.c.h.b16 %v829
    %v874 = vunpack.c.l.b16 %v830
    %v875 = vpack.c.b16 %v854, %v847
    %v876 = vpack.c.b16 %v855, %v848
    %v877 = vpack.c.b16 %v856, %v849
    %v878 = vpack.c.b16 %v857, %v850
    %v879 = vpack.c.b16 %v858, %v851
    %v880 = vpack.c.b16 %v859, %v852
    %v881 = vpack.c.b16 %v860, %v853
    %v882 = vpack.c.b16 %v868, %v861
    %v883 = vpack.c.b16 %v869, %v862
    %v884 = vpack.c.b16 %v870, %v863
    %v885 = vpack.c.b16 %v871, %v864
    %v886 = vpack.c.b16 %v872, %v865
    %v887 = vpack.c.b16 %v873, %v866
    %v888 = vpack.c.b16 %v874, %v867
    %889 = vrot.lane.b32.xlu0 %v875, 92
    %v890 = vpop.permute.xlu0 %889
    %891 = vrot.lane.b32.xlu0 %v876, 92
    %v892 = vpop.permute.xlu0 %891
    %893 = vrot.lane.b32.xlu0 %v877, 92
    %v894 = vpop.permute.xlu0 %893
    %895 = vrot.lane.b32.xlu0 %v878, 92
    %v896 = vpop.permute.xlu0 %895
    %897 = vrot.lane.b32.xlu0 %v879, 92
    %v898 = vpop.permute.xlu0 %897
    %899 = vrot.lane.b32.xlu0 %v880, 92
    %v900 = vpop.permute.xlu0 %899
    %901 = vrot.lane.b32.xlu0 %v881, 92
    %v902 = vpop.permute.xlu0 %901
    %903 = vrot.lane.b32.xlu0 %v882, 92
    %v904 = vpop.permute.xlu0 %903
    %905 = vrot.lane.b32.xlu0 %v883, 92
    %v906 = vpop.permute.xlu0 %905
    %907 = vrot.lane.b32.xlu0 %v884, 92
    %v908 = vpop.permute.xlu0 %907
    %909 = vrot.lane.b32.xlu0 %v885, 92
    %v910 = vpop.permute.xlu0 %909
    %911 = vrot.lane.b32.xlu0 %v886, 92
    %v912 = vpop.permute.xlu0 %911
    %913 = vrot.lane.b32.xlu0 %v887, 92
    %v914 = vpop.permute.xlu0 %913
    %915 = vrot.lane.b32.xlu0 %v888, 92
    %v916 = vpop.permute.xlu0 %915
    %vm917 = vcmask 752640
    %v918 = vsel %vm917, %v890, %v892
    %v919 = vsel %vm917, %v892, %v894
    %v920 = vsel %vm917, %v894, %v896
    %v921 = vsel %vm917, %v896, %v898
    %v922 = vsel %vm917, %v898, %v900
    %v923 = vsel %vm917, %v900, %v902
    %v924 = vsel %vm917, %v904, %v906
    %v925 = vsel %vm917, %v906, %v908
    %v926 = vsel %vm917, %v908, %v910
    %v927 = vsel %vm917, %v910, %v912
    %v928 = vsel %vm917, %v912, %v914
    %v929 = vsel %vm917, %v914, %v916
    %942 = vst [vmem:[#allocation2 + $0x240] sm:$0xff] %v918
    %943 = vst [vmem:[#allocation2 + $0x248] sm:$0xff] %v919
    %944 = vst [vmem:[#allocation2 + $0x250] sm:$0xff] %v920
    %945 = vst [vmem:[#allocation2 + $0x258] sm:$0xff] %v921
    %946 = vst [vmem:[#allocation2 + $0x260] sm:$0xff] %v922
    %947 = vst [vmem:[#allocation2 + $0x268] sm:$0xff] %v923
    %948 = vst [vmem:[#allocation2 + $0x270] sm:$0xff] %v924
    %949 = vst [vmem:[#allocation2 + $0x278] sm:$0xff] %v925
    %950 = vst [vmem:[#allocation2 + $0x280] sm:$0xff] %v926
    %951 = vst [vmem:[#allocation2 + $0x288] sm:$0xff] %v927
    %952 = vst [vmem:[#allocation2 + $0x290] sm:$0xff] %v928
    %953 = vst [vmem:[#allocation2 + $0x298] sm:$0xff] %v929
    %v954 = vld [vmem:[#allocation3] sm:$0xff]
    %v955 = vld [vmem:[#allocation3 + $0x8] sm:$0xff]
    %v956 = vld [vmem:[#allocation3 + $0x10] sm:$0xff]
    %v957 = vld [vmem:[#allocation3 + $0x18] sm:$0xf]
    %v958 = vld [vmem:[#allocation3 + $0x1c] sm:$0xff]
    %v959 = vld [vmem:[#allocation3 + $0x24] sm:$0xff]
    %v960 = vld [vmem:[#allocation3 + $0x2c] sm:$0xff]
    %v961 = vld [vmem:[#allocation3 + $0x34] sm:$0xf]
    %v962 = vld [vmem:[#allocation3 + $0x38] sm:$0xff]
    %v963 = vld [vmem:[#allocation3 + $0x40] sm:$0xff]
    %v964 = vld [vmem:[#allocation3 + $0x48] sm:$0xff]
    %v965 = vld [vmem:[#allocation3 + $0x50] sm:$0xf]
    %v966 = vld [vmem:[#allocation3 + $0x54] sm:$0xff]
    %v967 = vld [vmem:[#allocation3 + $0x5c] sm:$0xff]
    %v968 = vld [vmem:[#allocation3 + $0x64] sm:$0xff]
    %v969 = vld [vmem:[#allocation3 + $0x6c] sm:$0xf]
    %v986 = vunpack.c.l.b16 %v954
    %v987 = vunpack.c.h.b16 %v954
    %v988 = vunpack.c.l.b16 %v955
    %v989 = vunpack.c.h.b16 %v955
    %v990 = vunpack.c.l.b16 %v956
    %v991 = vunpack.c.h.b16 %v956
    %v992 = vunpack.c.l.b16 %v957
    %v993 = vunpack.c.l.b16 %v958
    %v994 = vunpack.c.h.b16 %v958
    %v995 = vunpack.c.l.b16 %v959
    %v996 = vunpack.c.h.b16 %v959
    %v997 = vunpack.c.l.b16 %v960
    %v998 = vunpack.c.h.b16 %v960
    %v999 = vunpack.c.l.b16 %v961
    %v1000 = vunpack.c.l.b16 %v962
    %v1001 = vunpack.c.h.b16 %v962
    %v1002 = vunpack.c.l.b16 %v963
    %v1003 = vunpack.c.h.b16 %v963
    %v1004 = vunpack.c.l.b16 %v964
    %v1005 = vunpack.c.h.b16 %v964
    %v1006 = vunpack.c.l.b16 %v965
    %v1007 = vunpack.c.l.b16 %v966
    %v1008 = vunpack.c.h.b16 %v966
    %v1009 = vunpack.c.l.b16 %v967
    %v1010 = vunpack.c.h.b16 %v967
    %v1011 = vunpack.c.l.b16 %v968
    %v1012 = vunpack.c.h.b16 %v968
    %v1013 = vunpack.c.l.b16 %v969
    %v1014 = vpack.c.b16 %v993, %v986
    %v1015 = vpack.c.b16 %v994, %v987
    %v1016 = vpack.c.b16 %v995, %v988
    %v1017 = vpack.c.b16 %v996, %v989
    %v1018 = vpack.c.b16 %v997, %v990
    %v1019 = vpack.c.b16 %v998, %v991
    %v1020 = vpack.c.b16 %v999, %v992
    %v1021 = vpack.c.b16 %v1007, %v1000
    %v1022 = vpack.c.b16 %v1008, %v1001
    %v1023 = vpack.c.b16 %v1009, %v1002
    %v1024 = vpack.c.b16 %v1010, %v1003
    %v1025 = vpack.c.b16 %v1011, %v1004
    %v1026 = vpack.c.b16 %v1012, %v1005
    %v1027 = vpack.c.b16 %v1013, %v1006
    %1028 = vrot.lane.b32.xlu0 %v1014, 91
    %v1029 = vpop.permute.xlu0 %1028
    %1030 = vrot.lane.b32.xlu0 %v1015, 91
    %v1031 = vpop.permute.xlu0 %1030
    %1032 = vrot.lane.b32.xlu0 %v1016, 91
    %v1033 = vpop.permute.xlu0 %1032
    %1034 = vrot.lane.b32.xlu0 %v1017, 91
    %v1035 = vpop.permute.xlu0 %1034
    %1036 = vrot.lane.b32.xlu0 %v1018, 91
    %v1037 = vpop.permute.xlu0 %1036
    %1038 = vrot.lane.b32.xlu0 %v1019, 91
    %v1039 = vpop.permute.xlu0 %1038
    %1040 = vrot.lane.b32.xlu0 %v1020, 91
    %v1041 = vpop.permute.xlu0 %1040
    %1042 = vrot.lane.b32.xlu0 %v1021, 91
    %v1043 = vpop.permute.xlu0 %1042
    %1044 = vrot.lane.b32.xlu0 %v1022, 91
    %v1045 = vpop.permute.xlu0 %1044
    %1046 = vrot.lane.b32.xlu0 %v1023, 91
    %v1047 = vpop.permute.xlu0 %1046
    %1048 = vrot.lane.b32.xlu0 %v1024, 91
    %v1049 = vpop.permute.xlu0 %1048
    %1050 = vrot.lane.b32.xlu0 %v1025, 91
    %v1051 = vpop.permute.xlu0 %1050
    %1052 = vrot.lane.b32.xlu0 %v1026, 91
    %v1053 = vpop.permute.xlu0 %1052
    %1054 = vrot.lane.b32.xlu0 %v1027, 91
    %v1055 = vpop.permute.xlu0 %1054
    %vm1056 = vcmask 744448
    %v1057 = vsel %vm1056, %v1029, %v1031
    %v1058 = vsel %vm1056, %v1031, %v1033
    %v1059 = vsel %vm1056, %v1033, %v1035
    %v1060 = vsel %vm1056, %v1035, %v1037
    %v1061 = vsel %vm1056, %v1037, %v1039
    %v1062 = vsel %vm1056, %v1039, %v1041
    %v1063 = vsel %vm1056, %v1043, %v1045
    %v1064 = vsel %vm1056, %v1045, %v1047
    %v1065 = vsel %vm1056, %v1047, %v1049
    %v1066 = vsel %vm1056, %v1049, %v1051
    %v1067 = vsel %vm1056, %v1051, %v1053
    %v1068 = vsel %vm1056, %v1053, %v1055
    %1081 = vst [vmem:[#allocation2 + $0x2a0] sm:$0xff] %v1057
    %1082 = vst [vmem:[#allocation2 + $0x2a8] sm:$0xff] %v1058
    %1083 = vst [vmem:[#allocation2 + $0x2b0] sm:$0xff] %v1059
    %1084 = vst [vmem:[#allocation2 + $0x2b8] sm:$0xff] %v1060
    %1085 = vst [vmem:[#allocation2 + $0x2c0] sm:$0xff] %v1061
    %1086 = vst [vmem:[#allocation2 + $0x2c8] sm:$0xff] %v1062
    %1087 = vst [vmem:[#allocation2 + $0x2d0] sm:$0xff] %v1063
    %1088 = vst [vmem:[#allocation2 + $0x2d8] sm:$0xff] %v1064
    %1089 = vst [vmem:[#allocation2 + $0x2e0] sm:$0xff] %v1065
    %1090 = vst [vmem:[#allocation2 + $0x2e8] sm:$0xff] %v1066
    %1091 = vst [vmem:[#allocation2 + $0x2f0] sm:$0xff] %v1067
    %1092 = vst [vmem:[#allocation2 + $0x2f8] sm:$0xff] %v1068
    %v1093 = vld [vmem:[#allocation3] sm:$0xff]
    %v1094 = vld [vmem:[#allocation3 + $0x8] sm:$0xff]
    %v1095 = vld [vmem:[#allocation3 + $0x10] sm:$0xff]
    %v1096 = vld [vmem:[#allocation3 + $0x18] sm:$0xf]
    %v1097 = vld [vmem:[#allocation3 + $0x1c] sm:$0xff]
    %v1098 = vld [vmem:[#allocation3 + $0x24] sm:$0xff]
    %v1099 = vld [vmem:[#allocation3 + $0x2c] sm:$0xff]
    %v1100 = vld [vmem:[#allocation3 + $0x34] sm:$0xf]
    %v1101 = vld [vmem:[#allocation3 + $0x38] sm:$0xff]
    %v1102 = vld [vmem:[#allocation3 + $0x40] sm:$0xff]
    %v1103 = vld [vmem:[#allocation3 + $0x48] sm:$0xff]
    %v1104 = vld [vmem:[#allocation3 + $0x50] sm:$0xf]
    %v1105 = vld [vmem:[#allocation3 + $0x54] sm:$0xff]
    %v1106 = vld [vmem:[#allocation3 + $0x5c] sm:$0xff]
    %v1107 = vld [vmem:[#allocation3 + $0x64] sm:$0xff]
    %v1108 = vld [vmem:[#allocation3 + $0x6c] sm:$0xf]
    %v1125 = vunpack.c.l.b16 %v1093
    %v1126 = vunpack.c.h.b16 %v1093
    %v1127 = vunpack.c.l.b16 %v1094
    %v1128 = vunpack.c.h.b16 %v1094
    %v1129 = vunpack.c.l.b16 %v1095
    %v1130 = vunpack.c.h.b16 %v1095
    %v1131 = vunpack.c.l.b16 %v1096
    %v1132 = vunpack.c.l.b16 %v1097
    %v1133 = vunpack.c.h.b16 %v1097
    %v1134 = vunpack.c.l.b16 %v1098
    %v1135 = vunpack.c.h.b16 %v1098
    %v1136 = vunpack.c.l.b16 %v1099
    %v1137 = vunpack.c.h.b16 %v1099
    %v1138 = vunpack.c.l.b16 %v1100
    %v1139 = vunpack.c.l.b16 %v1101
    %v1140 = vunpack.c.h.b16 %v1101
    %v1141 = vunpack.c.l.b16 %v1102
    %v1142 = vunpack.c.h.b16 %v1102
    %v1143 = vunpack.c.l.b16 %v1103
    %v1144 = vunpack.c.h.b16 %v1103
    %v1145 = vunpack.c.l.b16 %v1104
    %v1146 = vunpack.c.l.b16 %v1105
    %v1147 = vunpack.c.h.b16 %v1105
    %v1148 = vunpack.c.l.b16 %v1106
    %v1149 = vunpack.c.h.b16 %v1106
    %v1150 = vunpack.c.l.b16 %v1107
    %v1151 = vunpack.c.h.b16 %v1107
    %v1152 = vunpack.c.l.b16 %v1108
    %v1153 = vpack.c.b16 %v1132, %v1125
    %v1154 = vpack.c.b16 %v1133, %v1126
    %v1155 = vpack.c.b16 %v1134, %v1127
    %v1156 = vpack.c.b16 %v1135, %v1128
    %v1157 = vpack.c.b16 %v1136, %v1129
    %v1158 = vpack.c.b16 %v1137, %v1130
    %v1159 = vpack.c.b16 %v1138, %v1131
    %v1160 = vpack.c.b16 %v1146, %v1139
    %v1161 = vpack.c.b16 %v1147, %v1140
    %v1162 = vpack.c.b16 %v1148, %v1141
    %v1163 = vpack.c.b16 %v1149, %v1142
    %v1164 = vpack.c.b16 %v1150, %v1143
    %v1165 = vpack.c.b16 %v1151, %v1144
    %v1166 = vpack.c.b16 %v1152, %v1145
    %1167 = vrot.lane.b32.xlu0 %v1153, 90
    %v1168 = vpop.permute.xlu0 %1167
    %1169 = vrot.lane.b32.xlu0 %v1154, 90
    %v1170 = vpop.permute.xlu0 %1169
    %1171 = vrot.lane.b32.xlu0 %v1155, 90
    %v1172 = vpop.permute.xlu0 %1171
    %1173 = vrot.lane.b32.xlu0 %v1156, 90
    %v1174 = vpop.permute.xlu0 %1173
    %1175 = vrot.lane.b32.xlu0 %v1157, 90
    %v1176 = vpop.permute.xlu0 %1175
    %1177 = vrot.lane.b32.xlu0 %v1158, 90
    %v1178 = vpop.permute.xlu0 %1177
    %1179 = vrot.lane.b32.xlu0 %v1159, 90
    %v1180 = vpop.permute.xlu0 %1179
    %1181 = vrot.lane.b32.xlu0 %v1160, 90
    %v1182 = vpop.permute.xlu0 %1181
    %1183 = vrot.lane.b32.xlu0 %v1161, 90
    %v1184 = vpop.permute.xlu0 %1183
    %1185 = vrot.lane.b32.xlu0 %v1162, 90
    %v1186 = vpop.permute.xlu0 %1185
    %1187 = vrot.lane.b32.xlu0 %v1163, 90
    %v1188 = vpop.permute.xlu0 %1187
    %1189 = vrot.lane.b32.xlu0 %v1164, 90
    %v1190 = vpop.permute.xlu0 %1189
    %1191 = vrot.lane.b32.xlu0 %v1165, 90
    %v1192 = vpop.permute.xlu0 %1191
    %1193 = vrot.lane.b32.xlu0 %v1166, 90
    %v1194 = vpop.permute.xlu0 %1193
    %vm1195 = vcmask 736256
    %v1196 = vsel %vm1195, %v1168, %v1170
    %v1197 = vsel %vm1195, %v1170, %v1172
    %v1198 = vsel %vm1195, %v1172, %v1174
    %v1199 = vsel %vm1195, %v1174, %v1176
    %v1200 = vsel %vm1195, %v1176, %v1178
    %v1201 = vsel %vm1195, %v1178, %v1180
    %v1202 = vsel %vm1195, %v1182, %v1184
    %v1203 = vsel %vm1195, %v1184, %v1186
    %v1204 = vsel %vm1195, %v1186, %v1188
    %v1205 = vsel %vm1195, %v1188, %v1190
    %v1206 = vsel %vm1195, %v1190, %v1192
    %v1207 = vsel %vm1195, %v1192, %v1194
    %1220 = vst [vmem:[#allocation2 + $0x300] sm:$0xff] %v1196
    %1221 = vst [vmem:[#allocation2 + $0x308] sm:$0xff] %v1197
    %1222 = vst [vmem:[#allocation2 + $0x310] sm:$0xff] %v1198
    %1223 = vst [vmem:[#allocation2 + $0x318] sm:$0xff] %v1199
    %1224 = vst [vmem:[#allocation2 + $0x320] sm:$0xff] %v1200
    %1225 = vst [vmem:[#allocation2 + $0x328] sm:$0xff] %v1201
    %1226 = vst [vmem:[#allocation2 + $0x330] sm:$0xff] %v1202
    %1227 = vst [vmem:[#allocation2 + $0x338] sm:$0xff] %v1203
    %1228 = vst [vmem:[#allocation2 + $0x340] sm:$0xff] %v1204
    %1229 = vst [vmem:[#allocation2 + $0x348] sm:$0xff] %v1205
    %1230 = vst [vmem:[#allocation2 + $0x350] sm:$0xff] %v1206
    %1231 = vst [vmem:[#allocation2 + $0x358] sm:$0xff] %v1207
    %v1232 = vld [vmem:[%s1] sm:$0xff]
    %v1233 = vld [vmem:[%s1 + $0x8] sm:$0xf]
    %v1234 = vld [vmem:[%s1 + $0xc] sm:$0xff]
    %v1235 = vld [vmem:[%s1 + $0x14] sm:$0xf]
    %v1236 = vld [vmem:[#allocation2] sm:$0xff]
    %v1237 = vld [vmem:[#allocation2 + $0x8] sm:$0xff]
    %v1238 = vld [vmem:[#allocation2 + $0x10] sm:$0xff]
    %v1239 = vld [vmem:[#allocation2 + $0x18] sm:$0xff]
    %v1240 = vld [vmem:[#allocation2 + $0x20] sm:$0xff]
    %v1241 = vld [vmem:[#allocation2 + $0x28] sm:$0xff]
    %v1242 = vld [vmem:[#allocation2 + $0x30] sm:$0xff]
    %v1243 = vld [vmem:[#allocation2 + $0x38] sm:$0xff]
    %v1244 = vld [vmem:[#allocation2 + $0x40] sm:$0xff]
    %v1245 = vld [vmem:[#allocation2 + $0x48] sm:$0xff]
    %v1246 = vld [vmem:[#allocation2 + $0x50] sm:$0xff]
    %v1247 = vld [vmem:[#allocation2 + $0x58] sm:$0xff]
    %v1248 = vld [vmem:[#allocation2 + $0x60] sm:$0xff]
    %v1249 = vld [vmem:[#allocation2 + $0x68] sm:$0xff]
    %v1250 = vld [vmem:[#allocation2 + $0x70] sm:$0xff]
    %v1251 = vld [vmem:[#allocation2 + $0x78] sm:$0xff]
    %v1252 = vld [vmem:[#allocation2 + $0x80] sm:$0xff]
    %v1253 = vld [vmem:[#allocation2 + $0x88] sm:$0xff]
    %v1254 = vld [vmem:[#allocation2 + $0x90] sm:$0xff]
    %v1255 = vld [vmem:[#allocation2 + $0x98] sm:$0xff]
    %v1256 = vld [vmem:[#allocation2 + $0xa0] sm:$0xff]
    %v1257 = vld [vmem:[#allocation2 + $0xa8] sm:$0xff]
    %v1258 = vld [vmem:[#allocation2 + $0xb0] sm:$0xff]
    %v1259 = vld [vmem:[#allocation2 + $0xb8] sm:$0xff]
    %v1260 = vld [vmem:[#allocation2 + $0xc0] sm:$0xff]
    %v1261 = vld [vmem:[#allocation2 + $0xc8] sm:$0xff]
    %v1262 = vld [vmem:[#allocation2 + $0xd0] sm:$0xff]
    %v1263 = vld [vmem:[#allocation2 + $0xd8] sm:$0xff]
    %v1264 = vld [vmem:[#allocation2 + $0xe0] sm:$0xff]
    %v1265 = vld [vmem:[#allocation2 + $0xe8] sm:$0xff]
    %v1266 = vld [vmem:[#allocation2 + $0xf0] sm:$0xff]
    %v1267 = vld [vmem:[#allocation2 + $0xf8] sm:$0xff]
    %v1268 = vld [vmem:[#allocation2 + $0x100] sm:$0xff]
    %v1269 = vld [vmem:[#allocation2 + $0x108] sm:$0xff]
    %v1270 = vld [vmem:[#allocation2 + $0x110] sm:$0xff]
    %v1271 = vld [vmem:[#allocation2 + $0x118] sm:$0xff]
    %v1272 = vld [vmem:[#allocation2 + $0x120] sm:$0xff]
    %v1273 = vld [vmem:[#allocation2 + $0x128] sm:$0xff]
    %v1274 = vld [vmem:[#allocation2 + $0x130] sm:$0xff]
    %v1275 = vld [vmem:[#allocation2 + $0x138] sm:$0xff]
    %v1276 = vld [vmem:[#allocation2 + $0x140] sm:$0xff]
    %v1277 = vld [vmem:[#allocation2 + $0x148] sm:$0xff]
    %v1278 = vld [vmem:[#allocation2 + $0x150] sm:$0xff]
    %v1279 = vld [vmem:[#allocation2 + $0x158] sm:$0xff]
    %v1280 = vld [vmem:[#allocation2 + $0x160] sm:$0xff]
    %v1281 = vld [vmem:[#allocation2 + $0x168] sm:$0xff]
    %v1282 = vld [vmem:[#allocation2 + $0x170] sm:$0xff]
    %v1283 = vld [vmem:[#allocation2 + $0x178] sm:$0xff]
    %v1284 = vld [vmem:[#allocation2 + $0x180] sm:$0xff]
    %v1285 = vld [vmem:[#allocation2 + $0x188] sm:$0xff]
    %v1286 = vld [vmem:[#allocation2 + $0x190] sm:$0xff]
    %v1287 = vld [vmem:[#allocation2 + $0x198] sm:$0xff]
    %v1288 = vld [vmem:[#allocation2 + $0x1a0] sm:$0xff]
    %v1289 = vld [vmem:[#allocation2 + $0x1a8] sm:$0xff]
    %v1290 = vld [vmem:[#allocation2 + $0x1b0] sm:$0xff]
    %v1291 = vld [vmem:[#allocation2 + $0x1b8] sm:$0xff]
    %v1292 = vld [vmem:[#allocation2 + $0x1c0] sm:$0xff]
    %v1293 = vld [vmem:[#allocation2 + $0x1c8] sm:$0xff]
    %v1294 = vld [vmem:[#allocation2 + $0x1d0] sm:$0xff]
    %v1295 = vld [vmem:[#allocation2 + $0x1d8] sm:$0xff]
    %v1296 = vld [vmem:[#allocation2 + $0x1e0] sm:$0xff]
    %v1297 = vld [vmem:[#allocation2 + $0x1e8] sm:$0xff]
    %v1298 = vld [vmem:[#allocation2 + $0x1f0] sm:$0xff]
    %v1299 = vld [vmem:[#allocation2 + $0x1f8] sm:$0xff]
    %v1300 = vld [vmem:[#allocation2 + $0x200] sm:$0xff]
    %v1301 = vld [vmem:[#allocation2 + $0x208] sm:$0xff]
    %v1302 = vld [vmem:[#allocation2 + $0x210] sm:$0xff]
    %v1303 = vld [vmem:[#allocation2 + $0x218] sm:$0xff]
    %v1304 = vld [vmem:[#allocation2 + $0x220] sm:$0xff]
    %v1305 = vld [vmem:[#allocation2 + $0x228] sm:$0xff]
    %v1306 = vld [vmem:[#allocation2 + $0x230] sm:$0xff]
    %v1307 = vld [vmem:[#allocation2 + $0x238] sm:$0xff]
    %v1308 = vld [vmem:[#allocation2 + $0x240] sm:$0xff]
    %v1309 = vld [vmem:[#allocation2 + $0x248] sm:$0xff]
    %v1310 = vld [vmem:[#allocation2 + $0x250] sm:$0xff]
    %v1311 = vld [vmem:[#allocation2 + $0x258] sm:$0xff]
    %v1312 = vld [vmem:[#allocation2 + $0x260] sm:$0xff]
    %v1313 = vld [vmem:[#allocation2 + $0x268] sm:$0xff]
    %v1314 = vld [vmem:[#allocation2 + $0x270] sm:$0xff]
    %v1315 = vld [vmem:[#allocation2 + $0x278] sm:$0xff]
    %v1316 = vld [vmem:[#allocation2 + $0x280] sm:$0xff]
    %v1317 = vld [vmem:[#allocation2 + $0x288] sm:$0xff]
    %v1318 = vld [vmem:[#allocation2 + $0x290] sm:$0xff]
    %v1319 = vld [vmem:[#allocation2 + $0x298] sm:$0xff]
    %v1320 = vld [vmem:[#allocation2 + $0x2a0] sm:$0xff]
    %v1321 = vld [vmem:[#allocation2 + $0x2a8] sm:$0xff]
    %v1322 = vld [vmem:[#allocation2 + $0x2b0] sm:$0xff]
    %v1323 = vld [vmem:[#allocation2 + $0x2b8] sm:$0xff]
    %v1324 = vld [vmem:[#allocation2 + $0x2c0] sm:$0xff]
    %v1325 = vld [vmem:[#allocation2 + $0x2c8] sm:$0xff]
    %v1326 = vld [vmem:[#allocation2 + $0x2d0] sm:$0xff]
    %v1327 = vld [vmem:[#allocation2 + $0x2d8] sm:$0xff]
    %v1328 = vld [vmem:[#allocation2 + $0x2e0] sm:$0xff]
    %v1329 = vld [vmem:[#allocation2 + $0x2e8] sm:$0xff]
    %v1330 = vld [vmem:[#allocation2 + $0x2f0] sm:$0xff]
    %v1331 = vld [vmem:[#allocation2 + $0x2f8] sm:$0xff]
    %v1332 = vld [vmem:[#allocation2 + $0x300] sm:$0xff]
    %v1333 = vld [vmem:[#allocation2 + $0x308] sm:$0xff]
    %v1334 = vld [vmem:[#allocation2 + $0x310] sm:$0xff]
    %v1335 = vld [vmem:[#allocation2 + $0x318] sm:$0xff]
    %v1336 = vld [vmem:[#allocation2 + $0x320] sm:$0xff]
    %v1337 = vld [vmem:[#allocation2 + $0x328] sm:$0xff]
    %v1338 = vld [vmem:[#allocation2 + $0x330] sm:$0xff]
    %v1339 = vld [vmem:[#allocation2 + $0x338] sm:$0xff]
    %v1340 = vld [vmem:[#allocation2 + $0x340] sm:$0xff]
    %v1341 = vld [vmem:[#allocation2 + $0x348] sm:$0xff]
    %v1342 = vld [vmem:[#allocation2 + $0x350] sm:$0xff]
    %v1343 = vld [vmem:[#allocation2 + $0x358] sm:$0xff]
    %v1348 = vunpack.c.l.b16 %v1232
    %v1349 = vunpack.c.h.b16 %v1232
    %v1350 = vunpack.c.l.b16 %v1233
    %v1351 = vunpack.c.l.b16 %v1234
    %v1352 = vunpack.c.h.b16 %v1234
    %v1353 = vunpack.c.l.b16 %v1235
    %v1354 = vpack.c.b16 %v1351, %v1348
    %v1355 = vpack.c.b16 %v1352, %v1349
    %v1356 = vpack.c.b16 %v1353, %v1350
    %vm1359 = vcmask 261120
    %v1361 = vsel %vm1359, %v1356, 0
    %1363 = vmatprep.subr.bf16.mxu0 %v1237
    %1364 = vmatpush1.bf16.msra.mxu0 %v1236
    %1365 = vmatprep.subr.bf16.mxu0 %v1243
    %1366 = vmatpush1.bf16.msra.mxu0 %v1242
    %1367 = vmatprep.subr.bf16.mxu0 %v1249
    %1368 = vmatpush1.bf16.msra.mxu0 %v1248
    %1369 = vmatprep.subr.bf16.mxu0 %v1255
    %1370 = vmatpush1.bf16.msra.mxu0 %v1254
    %1371 = vmatprep.subr.bf16.mxu0 %v1261
    %1372 = vmatpush1.bf16.msra.mxu0 %v1260
    %1373 = vmatprep.subr.bf16.mxu0 %v1267
    %1374 = vmatpush1.bf16.msra.mxu0 %v1266
    %1375 = vmatprep.subr.bf16.mxu0 %v1273
    %1376 = vmatpush1.bf16.msra.mxu0 %v1272
    %1377 = vmatprep.subr.bf16.mxu0 %v1279
    %1378 = vmatpush1.bf16.msra.mxu0 %v1278
    %1379 = vmatprep.subr.bf16.mxu0 %v1285
    %1380 = vmatpush1.bf16.msra.mxu0 %v1284
    %1381 = vmatprep.subr.bf16.mxu0 %v1291
    %1382 = vmatpush1.bf16.msra.mxu0 %v1290
    %1383 = vmatprep.subr.bf16.mxu0 %v1297
    %1384 = vmatpush1.bf16.msra.mxu0 %v1296
    %1385 = vmatprep.subr.bf16.mxu0 %v1303
    %1386 = vmatpush1.bf16.msra.mxu0 %v1302
    %1387 = vmatprep.subr.bf16.mxu0 %v1309
    %1388 = vmatpush1.bf16.msra.mxu0 %v1308
    %1389 = vmatprep.subr.bf16.mxu0 %v1315
    %1390 = vmatpush1.bf16.msra.mxu0 %v1314
    %1391 = vmatprep.subr.bf16.mxu0 %v1321
    %1392 = vmatpush1.bf16.msra.mxu0 %v1320
    %1393 = vmatprep.subr.bf16.mxu0 %v1327
    %1394 = vmatpush1.bf16.msra.mxu0 %v1326
    %1395 = vmatprep.mubr.bf16.mxu0 %v1355
    %1396 = vmatmul.mubr.bf16.gmra.mrb[0].mxu0 %v1354
    %v1397 = vpop.f32.mrb[0].mxu0
    %v1398 = vadd.f32 0.0, %v1397
    %v1399 = vpop.f32.mrb[0].mxu0
    %v1400 = vadd.f32 0.0, %v1399
    %v1401 = vpop.f32.mrb[0].mxu0
    %v1402 = vadd.f32 0.0, %v1401
    %v1403 = vpop.f32.mrb[0].mxu0
    %v1404 = vadd.f32 0.0, %v1403
    %1405 = vdwg.mxu0
    %1406 = vmatprep.subr.bf16.mxu0 %v1333
    %1407 = vmatpush1.bf16.msra.mxu0 %v1332
    %1408 = vmatprep.subr.bf16.mxu0 %v1339
    %1409 = vmatpush1.bf16.msra.mxu0 %v1338
    %1410 = vmatprep.subr.bf16.mxu0 0
    %1411 = vmatpush1.bf16.msra.mxu0 0
    %1412 = vmatprep.subr.bf16.mxu0 0
    %1413 = vmatpush1.bf16.msra.mxu0 0
    %1414 = vmatprep.subr.bf16.mxu0 0
    %1415 = vmatpush1.bf16.msra.mxu0 0
    %1416 = vmatprep.subr.bf16.mxu0 0
    %1417 = vmatpush1.bf16.msra.mxu0 0
    %1418 = vmatprep.subr.bf16.mxu0 0
    %1419 = vmatpush1.bf16.msra.mxu0 0
    %1420 = vmatprep.subr.bf16.mxu0 0
    %1421 = vmatpush1.bf16.msra.mxu0 0
    %1422 = vmatprep.subr.bf16.mxu0 0
    %1423 = vmatpush1.bf16.msra.mxu0 0
    %1424 = vmatprep.subr.bf16.mxu0 0
    %1425 = vmatpush1.bf16.msra.mxu0 0
    %1426 = vmatprep.subr.bf16.mxu0 0
    %1427 = vmatpush1.bf16.msra.mxu0 0
    %1428 = vmatprep.subr.bf16.mxu0 0
    %1429 = vmatpush1.bf16.msra.mxu0 0
    %1430 = vmatprep.subr.bf16.mxu0 0
    %1431 = vmatpush1.bf16.msra.mxu0 0
    %1432 = vmatprep.subr.bf16.mxu0 0
    %1433 = vmatpush1.bf16.msra.mxu0 0
    %1434 = vmatprep.subr.bf16.mxu0 0
    %1435 = vmatpush1.bf16.msra.mxu0 0
    %1436 = vmatprep.subr.bf16.mxu0 0
    %1437 = vmatpush1.bf16.msra.mxu0 0
    %1438 = vmatprep.mubr.bf16.mxu0 0
    %1439 = vmatmul.mubr.bf16.gmra.mrb[0].mxu0 %v1361
    %v1440 = vpop.f32.mrb[0].mxu0
    %v1441 = vadd.f32 %v1398, %v1440
    %v1442 = vpop.f32.mrb[0].mxu0
    %v1443 = vadd.f32 %v1400, %v1442
    %v1444 = vpop.f32.mrb[0].mxu0
    %v1445 = vadd.f32 %v1402, %v1444
    %v1446 = vpop.f32.mrb[0].mxu0
    %v1447 = vadd.f32 %v1404, %v1446
    %1448 = vdwg.mxu0
    %1449 = vmatprep.subr.bf16.mxu0 %v1239
    %1450 = vmatpush1.bf16.msra.mxu0 %v1238
    %1451 = vmatprep.subr.bf16.mxu0 %v1245
    %1452 = vmatpush1.bf16.msra.mxu0 %v1244
    %1453 = vmatprep.subr.bf16.mxu0 %v1251
    %1454 = vmatpush1.bf16.msra.mxu0 %v1250
    %1455 = vmatprep.subr.bf16.mxu0 %v1257
    %1456 = vmatpush1.bf16.msra.mxu0 %v1256
    %1457 = vmatprep.subr.bf16.mxu0 %v1263
    %1458 = vmatpush1.bf16.msra.mxu0 %v1262
    %1459 = vmatprep.subr.bf16.mxu0 %v1269
    %1460 = vmatpush1.bf16.msra.mxu0 %v1268
    %1461 = vmatprep.subr.bf16.mxu0 %v1275
    %1462 = vmatpush1.bf16.msra.mxu0 %v1274
    %1463 = vmatprep.subr.bf16.mxu0 %v1281
    %1464 = vmatpush1.bf16.msra.mxu0 %v1280
    %1465 = vmatprep.subr.bf16.mxu0 %v1287
    %1466 = vmatpush1.bf16.msra.mxu0 %v1286
    %1467 = vmatprep.subr.bf16.mxu0 %v1293
    %1468 = vmatpush1.bf16.msra.mxu0 %v1292
    %1469 = vmatprep.subr.bf16.mxu0 %v1299
    %1470 = vmatpush1.bf16.msra.mxu0 %v1298
    %1471 = vmatprep.subr.bf16.mxu0 %v1305
    %1472 = vmatpush1.bf16.msra.mxu0 %v1304
    %1473 = vmatprep.subr.bf16.mxu0 %v1311
    %1474 = vmatpush1.bf16.msra.mxu0 %v1310
    %1475 = vmatprep.subr.bf16.mxu0 %v1317
    %1476 = vmatpush1.bf16.msra.mxu0 %v1316
    %1477 = vmatprep.subr.bf16.mxu0 %v1323
    %1478 = vmatpush1.bf16.msra.mxu0 %v1322
    %1479 = vmatprep.subr.bf16.mxu0 %v1329
    %1480 = vmatpush1.bf16.msra.mxu0 %v1328
    %1481 = vmatprep.mubr.bf16.mxu0 %v1355
    %1482 = vmatmul.mubr.bf16.gmra.mrb[0].mxu0 %v1354
    %v1483 = vpop.f32.mrb[0].mxu0
    %v1484 = vadd.f32 0.0, %v1483
    %v1485 = vpop.f32.mrb[0].mxu0
    %v1486 = vadd.f32 0.0, %v1485
    %v1487 = vpop.f32.mrb[0].mxu0
    %v1488 = vadd.f32 0.0, %v1487
    %v1489 = vpop.f32.mrb[0].mxu0
    %v1490 = vadd.f32 0.0, %v1489
    %1491 = vdwg.mxu0
    %1492 = vmatprep.subr.bf16.mxu0 %v1335
    %1493 = vmatpush1.bf16.msra.mxu0 %v1334
    %1494 = vmatprep.subr.bf16.mxu0 %v1341
    %1495 = vmatpush1.bf16.msra.mxu0 %v1340
    %1496 = vmatprep.subr.bf16.mxu0 0
    %1497 = vmatpush1.bf16.msra.mxu0 0
    %1498 = vmatprep.subr.bf16.mxu0 0
    %1499 = vmatpush1.bf16.msra.mxu0 0
    %1500 = vmatprep.subr.bf16.mxu0 0
    %1501 = vmatpush1.bf16.msra.mxu0 0
    %1502 = vmatprep.subr.bf16.mxu0 0
    %1503 = vmatpush1.bf16.msra.mxu0 0
    %1504 = vmatprep.subr.bf16.mxu0 0
    %1505 = vmatpush1.bf16.msra.mxu0 0
    %1506 = vmatprep.subr.bf16.mxu0 0
    %1507 = vmatpush1.bf16.msra.mxu0 0
    %1508 = vmatprep.subr.bf16.mxu0 0
    %1509 = vmatpush1.bf16.msra.mxu0 0
    %1510 = vmatprep.subr.bf16.mxu0 0
    %1511 = vmatpush1.bf16.msra.mxu0 0
    %1512 = vmatprep.subr.bf16.mxu0 0
    %1513 = vmatpush1.bf16.msra.mxu0 0
    %1514 = vmatprep.subr.bf16.mxu0 0
    %1515 = vmatpush1.bf16.msra.mxu0 0
    %1516 = vmatprep.subr.bf16.mxu0 0
    %1517 = vmatpush1.bf16.msra.mxu0 0
    %1518 = vmatprep.subr.bf16.mxu0 0
    %1519 = vmatpush1.bf16.msra.mxu0 0
    %1520 = vmatprep.subr.bf16.mxu0 0
    %1521 = vmatpush1.bf16.msra.mxu0 0
    %1522 = vmatprep.subr.bf16.mxu0 0
    %1523 = vmatpush1.bf16.msra.mxu0 0
    %1524 = vmatprep.mubr.bf16.mxu0 0
    %1525 = vmatmul.mubr.bf16.gmra.mrb[0].mxu0 %v1361
    %v1526 = vpop.f32.mrb[0].mxu0
    %v1527 = vadd.f32 %v1484, %v1526
    %v1528 = vpop.f32.mrb[0].mxu0
    %v1529 = vadd.f32 %v1486, %v1528
    %v1530 = vpop.f32.mrb[0].mxu0
    %v1531 = vadd.f32 %v1488, %v1530
    %v1532 = vpop.f32.mrb[0].mxu0
    %v1533 = vadd.f32 %v1490, %v1532
    %1534 = vdwg.mxu0
    %1535 = vmatprep.subr.bf16.mxu0 %v1241
    %1536 = vmatpush1.bf16.msra.mxu0 %v1240
    %1537 = vmatprep.subr.bf16.mxu0 %v1247
    %1538 = vmatpush1.bf16.msra.mxu0 %v1246
    %1539 = vmatprep.subr.bf16.mxu0 %v1253
    %1540 = vmatpush1.bf16.msra.mxu0 %v1252
    %1541 = vmatprep.subr.bf16.mxu0 %v1259
    %1542 = vmatpush1.bf16.msra.mxu0 %v1258
    %1543 = vmatprep.subr.bf16.mxu0 %v1265
    %1544 = vmatpush1.bf16.msra.mxu0 %v1264
    %1545 = vmatprep.subr.bf16.mxu0 %v1271
    %1546 = vmatpush1.bf16.msra.mxu0 %v1270
    %1547 = vmatprep.subr.bf16.mxu0 %v1277
    %1548 = vmatpush1.bf16.msra.mxu0 %v1276
    %1549 = vmatprep.subr.bf16.mxu0 %v1283
    %1550 = vmatpush1.bf16.msra.mxu0 %v1282
    %1551 = vmatprep.subr.bf16.mxu0 %v1289
    %1552 = vmatpush1.bf16.msra.mxu0 %v1288
    %1553 = vmatprep.subr.bf16.mxu0 %v1295
    %1554 = vmatpush1.bf16.msra.mxu0 %v1294
    %1555 = vmatprep.subr.bf16.mxu0 %v1301
    %1556 = vmatpush1.bf16.msra.mxu0 %v1300
    %1557 = vmatprep.subr.bf16.mxu0 %v1307
    %1558 = vmatpush1.bf16.msra.mxu0 %v1306
    %1559 = vmatprep.subr.bf16.mxu0 %v1313
    %1560 = vmatpush1.bf16.msra.mxu0 %v1312
    %1561 = vmatprep.subr.bf16.mxu0 %v1319
    %1562 = vmatpush1.bf16.msra.mxu0 %v1318
    %1563 = vmatprep.subr.bf16.mxu0 %v1325
    %1564 = vmatpush1.bf16.msra.mxu0 %v1324
    %1565 = vmatprep.subr.bf16.mxu0 %v1331
    %1566 = vmatpush1.bf16.msra.mxu0 %v1330
    %1567 = vmatprep.mubr.bf16.mxu0 %v1355
    %1568 = vmatmul.mubr.bf16.gmra.mrb[0].mxu0 %v1354
    %v1569 = vpop.f32.mrb[0].mxu0
    %v1570 = vadd.f32 0.0, %v1569
    %v1571 = vpop.f32.mrb[0].mxu0
    %v1572 = vadd.f32 0.0, %v1571
    %v1573 = vpop.f32.mrb[0].mxu0
    %v1574 = vadd.f32 0.0, %v1573
    %v1575 = vpop.f32.mrb[0].mxu0
    %v1576 = vadd.f32 0.0, %v1575
    %1577 = vdwg.mxu0
    %1578 = vmatprep.subr.bf16.mxu0 %v1337
    %1579 = vmatpush1.bf16.msra.mxu0 %v1336
    %1580 = vmatprep.subr.bf16.mxu0 %v1343
    %1581 = vmatpush1.bf16.msra.mxu0 %v1342
    %1582 = vmatprep.subr.bf16.mxu0 0
    %1583 = vmatpush1.bf16.msra.mxu0 0
    %1584 = vmatprep.subr.bf16.mxu0 0
    %1585 = vmatpush1.bf16.msra.mxu0 0
    %1586 = vmatprep.subr.bf16.mxu0 0
    %1587 = vmatpush1.bf16.msra.mxu0 0
    %1588 = vmatprep.subr.bf16.mxu0 0
    %1589 = vmatpush1.bf16.msra.mxu0 0
    %1590 = vmatprep.subr.bf16.mxu0 0
    %1591 = vmatpush1.bf16.msra.mxu0 0
    %1592 = vmatprep.subr.bf16.mxu0 0
    %1593 = vmatpush1.bf16.msra.mxu0 0
    %1594 = vmatprep.subr.bf16.mxu0 0
    %1595 = vmatpush1.bf16.msra.mxu0 0
    %1596 = vmatprep.subr.bf16.mxu0 0
    %1597 = vmatpush1.bf16.msra.mxu0 0
    %1598 = vmatprep.subr.bf16.mxu0 0
    %1599 = vmatpush1.bf16.msra.mxu0 0
    %1600 = vmatprep.subr.bf16.mxu0 0
    %1601 = vmatpush1.bf16.msra.mxu0 0
    %1602 = vmatprep.subr.bf16.mxu0 0
    %1603 = vmatpush1.bf16.msra.mxu0 0
    %1604 = vmatprep.subr.bf16.mxu0 0
    %1605 = vmatpush1.bf16.msra.mxu0 0
    %1606 = vmatprep.subr.bf16.mxu0 0
    %1607 = vmatpush1.bf16.msra.mxu0 0
    %1608 = vmatprep.subr.bf16.mxu0 0
    %1609 = vmatpush1.bf16.msra.mxu0 0
    %1610 = vmatprep.mubr.bf16.mxu0 0
    %1611 = vmatmul.mubr.bf16.gmra.mrb[0].mxu0 %v1361
    %v1612 = vpop.f32.mrb[0].mxu0
    %v1613 = vadd.f32 %v1570, %v1612
    %v1614 = vpop.f32.mrb[0].mxu0
    %v1615 = vadd.f32 %v1572, %v1614
    %v1616 = vpop.f32.mrb[0].mxu0
    %v1617 = vadd.f32 %v1574, %v1616
    %v1618 = vpop.f32.mrb[0].mxu0
    %v1619 = vadd.f32 %v1576, %v1618
    %1620 = vdwg.mxu0
    %v1621 = vld [vmem:[%s2] sm:$0x3f]
    %v1623 = vlaneseq
    %v1624 = vshrl.u32 %v1623, 7
    %v1625 = vsub.s32 0, %v1624
    %v1626 = vrot.slane %v1621, %v1625
    %v1627 = vlaneseq
    %v1628 = vshrl.u32 %v1627, 7
    %v1629 = vsub.s32 1, %v1628
    %v1630 = vrot.slane %v1621, %v1629
    %v1631 = vlaneseq
    %v1632 = vshrl.u32 %v1631, 7
    %v1633 = vsub.s32 2, %v1632
    %v1634 = vrot.slane %v1621, %v1633
    %v1635 = vlaneseq
    %v1636 = vshrl.u32 %v1635, 7
    %v1637 = vsub.s32 3, %v1636
    %v1638 = vrot.slane %v1621, %v1637
    %v1639 = vlaneseq
    %v1640 = vshrl.u32 %v1639, 7
    %v1641 = vsub.s32 4, %v1640
    %v1642 = vrot.slane %v1621, %v1641
    %v1643 = vlaneseq
    %v1644 = vshrl.u32 %v1643, 7
    %v1645 = vsub.s32 5, %v1644
    %v1646 = vrot.slane %v1621, %v1645
    %v1653 = vmul.f32 %v1441, %v1626
    %v1654 = vmul.f32 %v1443, %v1630
    %v1655 = vmul.f32 %v1527, %v1634
    %v1656 = vmul.f32 %v1529, %v1638
    %v1657 = vmul.f32 %v1613, %v1642
    %v1658 = vmul.f32 %v1615, %v1646
    %v1659 = vmul.f32 %v1445, %v1626
    %v1660 = vmul.f32 %v1447, %v1630
    %v1661 = vmul.f32 %v1531, %v1634
    %v1662 = vmul.f32 %v1533, %v1638
    %v1663 = vmul.f32 %v1617, %v1642
    %v1664 = vmul.f32 %v1619, %v1646
    %v1665 = vadd.f32 %v1653, %v1654
    %v1666 = vadd.f32 %v1665, %v1655
    %v1667 = vadd.f32 %v1666, %v1656
    %v1668 = vadd.f32 %v1667, %v1657
    %v1669 = vadd.f32 %v1668, %v1658
    %1670 = vadd.xlane.f32.xlu0 %v1669
    %v1671 = vpop.xlane.xlu0 %1670
    %v1672 = vadd.f32 %v1659, %v1660
    %v1673 = vadd.f32 %v1672, %v1661
    %v1674 = vadd.f32 %v1673, %v1662
    %v1675 = vadd.f32 %v1674, %v1663
    %v1676 = vadd.f32 %v1675, %v1664
    %1677 = vadd.xlane.f32.xlu0 %v1676
    %v1678 = vpop.xlane.xlu0 %1677
    %v1679 = vmul.f32 %v1653, %v1653
    %v1680 = vmul.f32 %v1654, %v1654
    %v1681 = vmul.f32 %v1655, %v1655
    %v1682 = vmul.f32 %v1656, %v1656
    %v1683 = vmul.f32 %v1657, %v1657
    %v1684 = vmul.f32 %v1658, %v1658
    %v1685 = vmul.f32 %v1659, %v1659
    %v1686 = vmul.f32 %v1660, %v1660
    %v1687 = vmul.f32 %v1661, %v1661
    %v1688 = vmul.f32 %v1662, %v1662
    %v1689 = vmul.f32 %v1663, %v1663
    %v1690 = vmul.f32 %v1664, %v1664
    %v1691 = vadd.f32 %v1679, %v1680
    %v1692 = vadd.f32 %v1691, %v1681
    %v1693 = vadd.f32 %v1692, %v1682
    %v1694 = vadd.f32 %v1693, %v1683
    %v1695 = vadd.f32 %v1694, %v1684
    %1696 = vadd.xlane.f32.xlu0 %v1695
    %v1697 = vpop.xlane.xlu0 %1696
    %v1698 = vadd.f32 %v1685, %v1686
    %v1699 = vadd.f32 %v1698, %v1687
    %v1700 = vadd.f32 %v1699, %v1688
    %v1701 = vadd.f32 %v1700, %v1689
    %v1702 = vadd.f32 %v1701, %v1690
    %1703 = vadd.xlane.f32.xlu0 %v1702
    %v1704 = vpop.xlane.xlu0 %1703
    %v1705 = vmul.f32 %v1671, 0.001953125
    %v1706 = vmul.f32 %v1678, 0.001953125
    %v1707 = vmul.f32 %v1697, 0.001953125
    %v1708 = vmul.f32 %v1704, 0.001953125
    %v1709 = vmul.f32 %v1705, %v1705
    %v1710 = vmul.f32 %v1706, %v1706
    %v1711 = vsub.f32 %v1707, %v1709
    %v1712 = vsub.f32 %v1708, %v1710
    %v1713 = vmax.f32 %v1711, 0.0
    %v1714 = vmax.f32 %v1712, 0.0
    %v1715 = vld [vmem:[%s3] sm:$0xff]
    %v1716 = vld [vmem:[%s3 + $0x8] sm:$0xff]
    %v1717 = vadd.f32 %v1713, 1e-05
    %v1718 = vadd.f32 %v1714, 1e-05
    %v1719 = vrsqrt.pop %v1717
    %v1720 = vrsqrt.pop %v1718
    %v1721 = vmul.f32 %v1715, %v1719
    %v1722 = vmul.f32 %v1716, %v1720
    %v1723 = vld [vmem:[%s4] sm:$0xff]
    %v1724 = vld [vmem:[%s4 + $0x8] sm:$0xff]
    %v1725 = vmul.f32 %v1705, %v1721
    %v1726 = vmul.f32 %v1706, %v1722
    %v1727 = vsub.f32 %v1723, %v1725
    %v1728 = vsub.f32 %v1724, %v1726
    %1730 = vset.pattern.permute.xlu0 0
    %1731 = vperm.xlu0 %1730, %v1721
    %v1732 = vpop.permute.xlu0 %1731
    %1735 = vset.pattern.permute.xlu0 0
    %1736 = vperm.xlu0 %1735, %v1722
    %v1737 = vpop.permute.xlu0 %1736
    %v1739 = vmul.f32 %v1441, %v1732
    %v1740 = vmul.f32 %v1443, %v1732
    %v1741 = vmul.f32 %v1527, %v1732
    %v1742 = vmul.f32 %v1529, %v1732
    %v1743 = vmul.f32 %v1613, %v1732
    %v1744 = vmul.f32 %v1615, %v1732
    %v1745 = vmul.f32 %v1445, %v1737
    %v1746 = vmul.f32 %v1447, %v1737
    %v1747 = vmul.f32 %v1531, %v1737
    %v1748 = vmul.f32 %v1533, %v1737
    %v1749 = vmul.f32 %v1617, %v1737
    %v1750 = vmul.f32 %v1619, %v1737
    %1752 = vset.pattern.permute.xlu0 0
    %1753 = vperm.xlu0 %1752, %v1727
    %v1754 = vpop.permute.xlu0 %1753
    %1757 = vset.pattern.permute.xlu0 0
    %1758 = vperm.xlu0 %1757, %v1728
    %v1759 = vpop.permute.xlu0 %1758
    %v1761 = vadd.f32 %v1739, %v1754
    %v1762 = vadd.f32 %v1740, %v1754
    %v1763 = vadd.f32 %v1741, %v1754
    %v1764 = vadd.f32 %v1742, %v1754
    %v1765 = vadd.f32 %v1743, %v1754
    %v1766 = vadd.f32 %v1744, %v1754
    %v1767 = vadd.f32 %v1745, %v1759
    %v1768 = vadd.f32 %v1746, %v1759
    %v1769 = vadd.f32 %v1747, %v1759
    %v1770 = vadd.f32 %v1748, %v1759
    %v1771 = vadd.f32 %v1749, %v1759
    %v1772 = vadd.f32 %v1750, %v1759
    %vm1773 = vcmp.gt.f32.partialorder %v1761, 0.0
    %vm1774 = vcmp.gt.f32.partialorder %v1762, 0.0
    %vm1775 = vcmp.gt.f32.partialorder %v1763, 0.0
    %vm1776 = vcmp.gt.f32.partialorder %v1764, 0.0
    %vm1777 = vcmp.gt.f32.partialorder %v1765, 0.0
    %vm1778 = vcmp.gt.f32.partialorder %v1766, 0.0
    %vm1779 = vcmp.gt.f32.partialorder %v1767, 0.0
    %vm1780 = vcmp.gt.f32.partialorder %v1768, 0.0
    %vm1781 = vcmp.gt.f32.partialorder %v1769, 0.0
    %vm1782 = vcmp.gt.f32.partialorder %v1770, 0.0
    %vm1783 = vcmp.gt.f32.partialorder %v1771, 0.0
    %vm1784 = vcmp.gt.f32.partialorder %v1772, 0.0
    %v1785 = vmul.f32 %v1761, 1.442695
    %v1786 = vpow.pop %v1785
    %v1787 = vmul.f32 %v1762, 1.442695
    %v1788 = vpow.pop %v1787
    %v1789 = vmul.f32 %v1763, 1.442695
    %v1790 = vpow.pop %v1789
    %v1791 = vmul.f32 %v1764, 1.442695
    %v1792 = vpow.pop %v1791
    %v1793 = vmul.f32 %v1765, 1.442695
    %v1794 = vpow.pop %v1793
    %v1795 = vmul.f32 %v1766, 1.442695
    %v1796 = vpow.pop %v1795
    %v1797 = vmul.f32 %v1767, 1.442695
    %v1798 = vpow.pop %v1797
    %v1799 = vmul.f32 %v1768, 1.442695
    %v1800 = vpow.pop %v1799
    %v1801 = vmul.f32 %v1769, 1.442695
    %v1802 = vpow.pop %v1801
    %v1803 = vmul.f32 %v1770, 1.442695
    %v1804 = vpow.pop %v1803
    %v1805 = vmul.f32 %v1771, 1.442695
    %v1806 = vpow.pop %v1805
    %v1807 = vmul.f32 %v1772, 1.442695
    %v1808 = vpow.pop %v1807
    %v1809 = vsub.f32 %v1786, 1.0
    %v1810 = vsub.f32 %v1788, 1.0
    %v1811 = vsub.f32 %v1790, 1.0
    %v1812 = vsub.f32 %v1792, 1.0
    %v1813 = vsub.f32 %v1794, 1.0
    %v1814 = vsub.f32 %v1796, 1.0
    %v1815 = vsub.f32 %v1798, 1.0
    %v1816 = vsub.f32 %v1800, 1.0
    %v1817 = vsub.f32 %v1802, 1.0
    %v1818 = vsub.f32 %v1804, 1.0
    %v1819 = vsub.f32 %v1806, 1.0
    %v1820 = vsub.f32 %v1808, 1.0
    %v1821 = vmul.f32 %v1809, 1.6732632
    %v1822 = vmul.f32 %v1810, 1.6732632
    %v1823 = vmul.f32 %v1811, 1.6732632
    %v1824 = vmul.f32 %v1812, 1.6732632
    %v1825 = vmul.f32 %v1813, 1.6732632
    %v1826 = vmul.f32 %v1814, 1.6732632
    %v1827 = vmul.f32 %v1815, 1.6732632
    %v1828 = vmul.f32 %v1816, 1.6732632
    %v1829 = vmul.f32 %v1817, 1.6732632
    %v1830 = vmul.f32 %v1818, 1.6732632
    %v1831 = vmul.f32 %v1819, 1.6732632
    %v1832 = vmul.f32 %v1820, 1.6732632
    %v1833 = vsel %vm1773, %v1761, %v1821
    %v1834 = vsel %vm1774, %v1762, %v1822
    %v1835 = vsel %vm1775, %v1763, %v1823
    %v1836 = vsel %vm1776, %v1764, %v1824
    %v1837 = vsel %vm1777, %v1765, %v1825
    %v1838 = vsel %vm1778, %v1766, %v1826
    %v1839 = vsel %vm1779, %v1767, %v1827
    %v1840 = vsel %vm1780, %v1768, %v1828
    %v1841 = vsel %vm1781, %v1769, %v1829
    %v1842 = vsel %vm1782, %v1770, %v1830
    %v1843 = vsel %vm1783, %v1771, %v1831
    %v1844 = vsel %vm1784, %v1772, %v1832
    %v1845 = vmul.f32 %v1833, 1.050701
    %v1846 = vmul.f32 %v1834, 1.050701
    %v1847 = vmul.f32 %v1835, 1.050701
    %v1848 = vmul.f32 %v1836, 1.050701
    %v1849 = vmul.f32 %v1837, 1.050701
    %v1850 = vmul.f32 %v1838, 1.050701
    %v1851 = vmul.f32 %v1839, 1.050701
    %v1852 = vmul.f32 %v1840, 1.050701
    %v1853 = vmul.f32 %v1841, 1.050701
    %v1854 = vmul.f32 %v1842, 1.050701
    %v1855 = vmul.f32 %v1843, 1.050701
    %v1856 = vmul.f32 %v1844, 1.050701
    %1857 = vst [vmem:[#allocation6] sm:$0xff] %v1845
    %1858 = vst [vmem:[#allocation6 + $0x8] sm:$0xff] %v1846
    %1859 = vst [vmem:[#allocation6 + $0x10] sm:$0xff] %v1847
    %1860 = vst [vmem:[#allocation6 + $0x18] sm:$0xff] %v1848
    %1861 = vst [vmem:[#allocation6 + $0x20] sm:$0xff] %v1849
    %1862 = vst [vmem:[#allocation6 + $0x28] sm:$0xff] %v1850
    %1863 = vst [vmem:[#allocation6 + $0x30] sm:$0xff] %v1851
    %1864 = vst [vmem:[#allocation6 + $0x38] sm:$0xff] %v1852
    %1865 = vst [vmem:[#allocation6 + $0x40] sm:$0xff] %v1853
    %1866 = vst [vmem:[#allocation6 + $0x48] sm:$0xff] %v1854
    %1867 = vst [vmem:[#allocation6 + $0x50] sm:$0xff] %v1855
    %1868 = vst [vmem:[#allocation6 + $0x58] sm:$0xff] %v1856
    // Predicated region
    $region26: #{tpu_custom_call.1} parent=1 // pred_check
      _
    $region27: #{tpu_custom_call.1} parent=1 // pred_check_branch
      %1870 = sbr.rel (0) target = $region29
    $region28: #{tpu_custom_call.1} parent=1 // pred_region
      %s1872 = ssub.s32 1536, 1536
      %1873 = vsyncadd [#allocation5], %s1872
      %s1874 = sshll.u32 [#allocation6], 4
      %s1875 = int_to_ptr.vmem [resolvable:$true] %s1874
      %1880 = dma.vmem_to_hbm [thread:$0]  %s1875, 1536, %s5, [#allocation5], 768, 768, 48
    $region29: #{tpu_custom_call.1} parent=1 // pred_fallthru
      _
    // Predicated region
    $region30: #{tpu_custom_call.1} parent=1 // pred_check
      _
    $region31: #{tpu_custom_call.1} parent=1 // pred_check_branch
      %1882 = sbr.rel (0) target = $region33
    $region32: #{tpu_custom_call.1} parent=1 // pred_region
      %1883 = dma.done [#allocation5], 1536
    $region33: #{tpu_custom_call.1} parent=1 // pred_fallthru
      _
    %1884 = vsyncpa [#allocation4], 1
    %1885 = vsyncpa [#allocation5], 1

</llo_original>
